<compile_context>
chip_gen: v5e
topology: v5e:2x2
jax: 0.10.0
libtpu: 0.0.40
codegen_flags: <defaults>
</compile_context>

<pallas_src>
import jax
import jax.numpy as jnp
from jax.experimental import pallas as pl
from jax.experimental.pallas import tpu as pltpu

F_IN = 784          # flattened MNIST image
F_PAD = 896         # 7 * 128 -> lane-dense padding of the 784-wide dim


def _round_up(n, m):
    return ((n + m - 1) // m) * m


def _default_block_b():
    """Generation-aware batch tile: big tiles on v5e/v6e (128 MiB VMEM, 1 TC),
    small per-core tiles on v7x (64 MiB VMEM, 2 TCs)."""
    try:
        kind = jax.devices()[0].device_kind.lower()
    except Exception:
        return 256
    if "7" in kind:                     # v7x: keep per-core tiles modest
        return 128
    if "v6" in kind or "v5" in kind:    # v5e / v6e: amortize per-step overhead
        return 512
    return 256


def _pick_tile(B, block_b):
    """Pick a batch tile that (a) divides the padded batch, (b) gives >= 2 grid
    steps whenever B > 16 (so v7x can shard across both TensorCores and the
    x/xhat DMAs pipeline), (c) never exceeds block_b."""
    if B <= 16:
        return B
    tb = min(block_b, _round_up(pl.cdiv(B, 2), 16))
    return max(16, tb)


def vae_kernel(x_ref, w1_ref, b1_ref, w2_ref, b2_ref, eps_ref,
               w3_ref, b3_ref, w4_ref, b4_ref,
               xhat_ref, mulv_ref):
    d = eps_ref.shape[-1]

    # ---- encoder ----
    x = x_ref[...]                                                    # (TB, 896) bf16
    h1 = jnp.dot(x, w1_ref[...],
                 preferred_element_type=jnp.float32) + b1_ref[...]    # f32 accumulate
    h1 = jnp.maximum(h1, 0.0)                                         # ReLU (TB, d^2)

    # fused mu|logvar head, padded to 128 output lanes (zero weight columns)
    mulv = jnp.dot(h1.astype(jnp.bfloat16), w2_ref[...],
                   preferred_element_type=jnp.float32) + b2_ref[...]  # (TB, MLV)
    mu = mulv[:, :d]
    logvar = mulv[:, d:2 * d]

    # ---- reparameterise (training path): z = eps * exp(0.5*logvar) + mu ----
    std = jnp.exp(0.5 * logvar)
    z = eps_ref[...] * std + mu                                       # (TB, d) f32

    # ---- decoder ----
    h2 = jnp.dot(z.astype(jnp.bfloat16), w3_ref[...],
                 preferred_element_type=jnp.float32) + b3_ref[...]
    h2 = jnp.maximum(h2, 0.0)                                         # ReLU (TB, d^2)
    logits = jnp.dot(h2.astype(jnp.bfloat16), w4_ref[...],
                     preferred_element_type=jnp.float32) + b4_ref[...]

    # sigmoid on the EUP slot: exp + approximate reciprocal
    e = jnp.exp(-logits)
    xhat = pl.reciprocal(1.0 + e, approx=True)

    xhat_ref[...] = xhat.astype(xhat_ref.dtype)                       # bf16, lane-dense
    mulv_ref[...] = mulv.astype(mulv_ref.dtype)                       # f32, lane-dense


def vae_forward(x, kparams, eps, *, block_b=None):
    """x: (B, 784) f32, eps: (B, d) f32, kparams from prepare_kernel_params.
    Returns (x_hat (B,784) f32, mu (B,d) f32, logvar (B,d) f32)."""
    B = x.shape[0]
    d = eps.shape[1]
    dd = d * d
    mlv = kparams["b2"].shape[1]          # padded mu|logvar lane width (>= 128)

    if block_b is None:
        block_b = _default_block_b()
    TB = _pick_tile(B, block_b)
    B_pad = _round_up(B, TB)
    grid = (B_pad // TB,)

    # pad batch rows (zeros -> finite garbage, sliced away) and the 784-wide
    # image dim to 896 lanes; stream x as bf16 (half the dominant DMA traffic)
    x_p = jnp.pad(x, ((0, B_pad - B), (0, F_PAD - F_IN))).astype(jnp.bfloat16)
    eps_p = jnp.pad(eps, ((0, B_pad - B), (0, 0)))

    def tile(cols):                       # batch-tiled activations / outputs
        return pl.BlockSpec((TB, cols), lambda i: (i, 0))

    def resident(shape):                  # weights/biases stay VMEM-resident
        return pl.BlockSpec(shape, lambda i: (0, 0))

    w_bytes = sum(int(a.size) * a.dtype.itemsize for a in kparams.values())
    cost = pl.CostEstimate(
        flops=2 * B_pad * (F_PAD * dd + dd * mlv + d * dd + dd * F_PAD),
        transcendentals=B_pad * (d + 2 * F_PAD),          # exp(std) + (exp+recip) sigmoid
        bytes_accessed=(w_bytes
                        + B_pad * (2 * F_PAD + 4 * d)     # x (bf16) + eps (f32)
                        + B_pad * (2 * F_PAD + 4 * mlv)), # xhat (bf16) + mulv (f32)
    )

    xhat_p, mulv = pl.pallas_call(
        vae_kernel,
        out_shape=(
            jax.ShapeDtypeStruct((B_pad, F_PAD), jnp.bfloat16),   # padded x_hat
            jax.ShapeDtypeStruct((B_pad, mlv), jnp.float32),      # [mu | logvar | 0-pad]
        ),
        grid=grid,
        in_specs=[
            tile(F_PAD),                  # x (bf16)
            resident((F_PAD, dd)),        # w1 (bf16)
            resident((1, dd)),            # b1 (f32)
            resident((dd, mlv)),          # w2 (bf16, fused + lane-padded head)
            resident((1, mlv)),           # b2 (f32, lane-padded)
            tile(d),                      # eps (f32)
            resident((d, dd)),            # w3 (bf16)
            resident((1, dd)),            # b3 (f32)
            resident((dd, F_PAD)),        # w4 (bf16, cols padded with zeros)
            resident((1, F_PAD)),         # b4 (f32, tail zeros)
        ],
        out_specs=(tile(F_PAD), tile(mlv)),
        compiler_params=pltpu.CompilerParams(
            dimension_semantics=("parallel",)),
        cost_estimate=cost,
    )(
        x_p,
        kparams["w1"], kparams["b1"],
        kparams["w2"], kparams["b2"],
        eps_p,
        kparams["w3"], kparams["b3"],
        kparams["w4"], kparams["b4"],
    )

    x_hat = xhat_p[:B, :F_IN].astype(jnp.float32)
    mu = mulv[:B, :d]
    logvar = mulv[:B, d:2 * d]
    return x_hat, mu, logvar


def init_params(key, d):
    """Deterministic synthetic parameters with PyTorch nn.Linear init, already
    transposed to (in, out) and biases shaped (1, out). Float32, unpadded."""
    ks = jax.random.split(key, 8)

    def lin(kw, kb, fan_in, fan_out):
        bound = 1.0 / jnp.sqrt(fan_in)
        w = jax.random.uniform(kw, (fan_in, fan_out), jnp.float32, -bound, bound)
        b = jax.random.uniform(kb, (1, fan_out), jnp.float32, -bound, bound)
        return w, b

    w1, b1 = lin(ks[0], ks[1], F_IN, d * d)        # encoder Linear(784, d^2)
    w2, b2 = lin(ks[2], ks[3], d * d, 2 * d)       # encoder Linear(d^2, 2d)
    w3, b3 = lin(ks[4], ks[5], d, d * d)           # decoder Linear(d, d^2)
    w4, b4 = lin(ks[6], ks[7], d * d, F_IN)        # decoder Linear(d^2, 784)
    return {"w1": w1, "b1": b1, "w2": w2, "b2": b2,
            "w3": w3, "b3": b3, "w4": w4, "b4": b4}


def prepare_kernel_params(params):
    """Kernel-ready params: pad the 784-dim edges to 896 lanes (zeros), pad the
    fused mu|logvar head to a 128-lane multiple, cast all weights to bf16
    (f32 accumulation in-kernel); biases stay f32."""
    d = params["w3"].shape[0]
    mlv = max(128, _round_up(2 * d, 128))
    bf = jnp.bfloat16
    w1 = jnp.pad(params["w1"], ((0, F_PAD - F_IN), (0, 0)))   # zero rows: exact
    w2 = jnp.pad(params["w2"], ((0, 0), (0, mlv - 2 * d)))    # zero cols: lane-dense store
    b2 = jnp.pad(params["b2"], ((0, 0), (0, mlv - 2 * d)))
    w4 = jnp.pad(params["w4"], ((0, 0), (0, F_PAD - F_IN)))   # zero cols: sliced away
    b4 = jnp.pad(params["b4"], ((0, 0), (0, F_PAD - F_IN)))
    return {
        "w1": w1.astype(bf), "b1": params["b1"],
        "w2": w2.astype(bf), "b2": b2,
        "w3": params["w3"].astype(bf), "b3": params["b3"],
        "w4": w4.astype(bf), "b4": b4,
    }


def vae_reference_f32(x, params, eps):
    """Pure-JAX f32 reference (module semantics)."""
    d = eps.shape[1]
    h1 = jnp.maximum(x @ params["w1"] + params["b1"], 0.0)
    mulv = h1 @ params["w2"] + params["b2"]
    mu, logvar = mulv[:, :d], mulv[:, d:]
    z = eps * jnp.exp(0.5 * logvar) + mu
    h2 = jnp.maximum(z @ params["w3"] + params["b3"], 0.0)
    xhat = jax.nn.sigmoid(h2 @ params["w4"] + params["b4"])
    return xhat, mu, logvar


def vae_reference_mirrored(x, kparams, eps):
    """Pure-JAX mirror of the kernel math (bf16 MXU inputs, padded dims,
    bf16 x_hat output)."""
    d = eps.shape[1]
    x_p = jnp.pad(x, ((0, 0), (0, F_PAD - F_IN))).astype(jnp.bfloat16)
    h1 = jnp.maximum(
        jnp.dot(x_p, kparams["w1"],
                preferred_element_type=jnp.float32) + kparams["b1"], 0.0)
    mulv = jnp.dot(h1.astype(jnp.bfloat16), kparams["w2"],
                   preferred_element_type=jnp.float32) + kparams["b2"]
    mu, logvar = mulv[:, :d], mulv[:, d:2 * d]
    z = eps * jnp.exp(0.5 * logvar) + mu
    h2 = jnp.maximum(
        jnp.dot(z.astype(jnp.bfloat16), kparams["w3"],
                preferred_element_type=jnp.float32) + kparams["b3"], 0.0)
    logits = jnp.dot(h2.astype(jnp.bfloat16), kparams["w4"],
                     preferred_element_type=jnp.float32) + kparams["b4"]
    xhat = jax.nn.sigmoid(logits).astype(jnp.bfloat16).astype(jnp.float32)
    return xhat[:, :F_IN], mu, logvar


if __name__ == "__main__":
    d = 16          # latent dim (hidden = d^2 = 256)
    B = 8           # small batch for the smoke test (single grid step)

    key = jax.random.PRNGKey(0)
    k_x, k_eps, k_p, k_x2, k_e2 = jax.random.split(key, 5)

    x = jax.random.uniform(k_x, (B, F_IN), jnp.float32)     # flattened MNIST-like
    eps = jax.random.normal(k_eps, (B, d), jnp.float32)
    params = init_params(k_p, d)
    kparams = prepare_kernel_params(params)

    x_hat, mu, logvar = vae_forward(x, kparams, eps)
    jax.block_until_ready((x_hat, mu, logvar))

    # exact-math check (same bf16/padded math in pure JAX)
    m_xhat, m_mu, m_lv = vae_reference_mirrored(x, kparams, eps)
    assert jnp.allclose(mu, m_mu, atol=5e-3, rtol=5e-3)
    assert jnp.allclose(logvar, m_lv, atol=5e-3, rtol=5e-3)
    assert jnp.allclose(x_hat, m_xhat, atol=1e-2, rtol=1e-2)   # approx recip + bf16 out

    # fidelity check against the full-f32 module semantics
    r_xhat, r_mu, r_lv = vae_reference_f32(x, params, eps)
    assert jnp.allclose(x_hat, r_xhat, atol=3e-2, rtol=3e-2)
    assert jnp.allclose(mu, r_mu, atol=3e-2, rtol=3e-2)
    assert jnp.allclose(logvar, r_lv, atol=3e-2, rtol=3e-2)
    assert x_hat.shape == (B, F_IN) and mu.shape == (B, d) and logvar.shape == (B, d)

    # non-divisible batch: exercises row padding + >= 2 grid steps (megacore path)
    B2 = 100
    x2 = jax.random.uniform(k_x2, (B2, F_IN), jnp.float32)
    eps2 = jax.random.normal(k_e2, (B2, d), jnp.float32)
    xh2, mu2, lv2 = vae_forward(x2, kparams, eps2)
    jax.block_until_ready((xh2, mu2, lv2))
    r_xh2, r_mu2, r_lv2 = vae_reference_f32(x2, params, eps2)
    assert xh2.shape == (B2, F_IN) and mu2.shape == (B2, d) and lv2.shape == (B2, d)
    assert jnp.allclose(xh2, r_xh2, atol=3e-2, rtol=3e-2)
    assert jnp.allclose(mu2, r_mu2, atol=3e-2, rtol=3e-2)
    assert jnp.allclose(lv2, r_lv2, atol=3e-2, rtol=3e-2)

    print("KERNEL_OK")
</pallas_src>

<mosaic_0001>
module attributes {stable_mosaic.version = 11 : i64} {
  func.func @vae_kernel(%arg0: i32, %arg1: memref<8x896xbf16, #tpu.memory_space<vmem>>, %arg2: memref<896x256xbf16, #tpu.memory_space<vmem>>, %arg3: memref<1x256xf32, #tpu.memory_space<vmem>>, %arg4: memref<256x128xbf16, #tpu.memory_space<vmem>>, %arg5: memref<1x128xf32, #tpu.memory_space<vmem>>, %arg6: memref<8x16xf32, #tpu.memory_space<vmem>>, %arg7: memref<16x256xbf16, #tpu.memory_space<vmem>>, %arg8: memref<1x256xf32, #tpu.memory_space<vmem>>, %arg9: memref<256x896xbf16, #tpu.memory_space<vmem>>, %arg10: memref<1x896xf32, #tpu.memory_space<vmem>>, %arg11: memref<8x896xbf16, #tpu.memory_space<vmem>>, %arg12: memref<8x128xf32, #tpu.memory_space<vmem>>) attributes {dimension_semantics = [#tpu.dimension_semantics<parallel>], iteration_bounds = array<i64: 1>, scalar_prefetch = 0 : i64, scratch_operands = 0 : i64, tpu.core_type = #tpu.core_type<tc>, window_params = [{transform_indices = @transform_0, window_bounds = array<i64: 8, 896>}, {pipeline_mode = #tpu.pipeline_mode<synchronous>, transform_indices = @transform_1, window_bounds = array<i64: 896, 256>}, {pipeline_mode = #tpu.pipeline_mode<synchronous>, transform_indices = @transform_2, window_bounds = array<i64: 1, 256>}, {pipeline_mode = #tpu.pipeline_mode<synchronous>, transform_indices = @transform_3, window_bounds = array<i64: 256, 128>}, {pipeline_mode = #tpu.pipeline_mode<synchronous>, transform_indices = @transform_4, window_bounds = array<i64: 1, 128>}, {transform_indices = @transform_5, window_bounds = array<i64: 8, 16>}, {pipeline_mode = #tpu.pipeline_mode<synchronous>, transform_indices = @transform_6, window_bounds = array<i64: 16, 256>}, {pipeline_mode = #tpu.pipeline_mode<synchronous>, transform_indices = @transform_7, window_bounds = array<i64: 1, 256>}, {pipeline_mode = #tpu.pipeline_mode<synchronous>, transform_indices = @transform_8, window_bounds = array<i64: 256, 896>}, {pipeline_mode = #tpu.pipeline_mode<synchronous>, transform_indices = @transform_9, window_bounds = array<i64: 1, 896>}, {transform_indices = @transform_10, window_bounds = array<i64: 8, 896>}, {transform_indices = @transform_11, window_bounds = array<i64: 8, 128>}]} {
    %c0 = arith.constant 0 : index
    %c0_0 = arith.constant 0 : index
    %0 = vector.load %arg1[%c0, %c0_0] : memref<8x896xbf16, #tpu.memory_space<vmem>>, vector<8x896xbf16>
    %c0_1 = arith.constant 0 : index
    %c0_2 = arith.constant 0 : index
    %1 = vector.load %arg2[%c0_1, %c0_2] : memref<896x256xbf16, #tpu.memory_space<vmem>>, vector<896x256xbf16>
    %cst = arith.constant dense<0.000000e+00> : vector<8x256xf32>
    %2 = tpu.matmul %0, %1, %cst {dimension_numbers = #tpu.dot_dimension_numbers<[1], [0], [0], [1], [0, 0, 1, 1], [], []>} : vector<8x896xbf16>, vector<896x256xbf16>, vector<8x256xf32> -> vector<8x256xf32>
    %c0_3 = arith.constant 0 : index
    %c0_4 = arith.constant 0 : index
    %3 = vector.load %arg3[%c0_3, %c0_4] : memref<1x256xf32, #tpu.memory_space<vmem>>, vector<1x256xf32>
    %4 = vector.broadcast %3 : vector<1x256xf32> to vector<8x256xf32>
    %5 = arith.addf %2, %4 : vector<8x256xf32>
    %cst_5 = arith.constant 0.000000e+00 : f32
    %6 = vector.broadcast %cst_5 : f32 to vector<8x256xf32>
    %7 = arith.maximumf %5, %6 : vector<8x256xf32>
    %8 = arith.truncf %7 : vector<8x256xf32> to vector<8x256xbf16>
    %c0_6 = arith.constant 0 : index
    %c0_7 = arith.constant 0 : index
    %9 = vector.load %arg4[%c0_6, %c0_7] : memref<256x128xbf16, #tpu.memory_space<vmem>>, vector<256x128xbf16>
    %cst_8 = arith.constant dense<0.000000e+00> : vector<8x128xf32>
    %10 = tpu.matmul %8, %9, %cst_8 {dimension_numbers = #tpu.dot_dimension_numbers<[1], [0], [0], [1], [0, 0, 1, 1], [], []>} : vector<8x256xbf16>, vector<256x128xbf16>, vector<8x128xf32> -> vector<8x128xf32>
    %c0_9 = arith.constant 0 : index
    %c0_10 = arith.constant 0 : index
    %11 = vector.load %arg5[%c0_9, %c0_10] : memref<1x128xf32, #tpu.memory_space<vmem>>, vector<1x128xf32>
    %12 = vector.broadcast %11 : vector<1x128xf32> to vector<8x128xf32>
    %13 = arith.addf %10, %12 : vector<8x128xf32>
    %14 = vector.extract_strided_slice %13 {offsets = [0, 0], sizes = [8, 16], strides = [1, 1]} : vector<8x128xf32> to vector<8x16xf32>
    %15 = vector.extract_strided_slice %13 {offsets = [0, 16], sizes = [8, 16], strides = [1, 1]} : vector<8x128xf32> to vector<8x16xf32>
    %cst_11 = arith.constant 5.000000e-01 : f32
    %16 = vector.broadcast %cst_11 : f32 to vector<8x16xf32>
    %17 = arith.mulf %16, %15 : vector<8x16xf32>
    %18 = math.exp %17 : vector<8x16xf32>
    %c0_12 = arith.constant 0 : index
    %c0_13 = arith.constant 0 : index
    %19 = vector.load %arg6[%c0_12, %c0_13] : memref<8x16xf32, #tpu.memory_space<vmem>>, vector<8x16xf32>
    %20 = arith.mulf %19, %18 : vector<8x16xf32>
    %21 = arith.addf %20, %14 : vector<8x16xf32>
    %22 = arith.truncf %21 : vector<8x16xf32> to vector<8x16xbf16>
    %c0_14 = arith.constant 0 : index
    %c0_15 = arith.constant 0 : index
    %23 = vector.load %arg7[%c0_14, %c0_15] : memref<16x256xbf16, #tpu.memory_space<vmem>>, vector<16x256xbf16>
    %cst_16 = arith.constant dense<0.000000e+00> : vector<8x256xf32>
    %24 = tpu.matmul %22, %23, %cst_16 {dimension_numbers = #tpu.dot_dimension_numbers<[1], [0], [0], [1], [0, 0, 1, 1], [], []>} : vector<8x16xbf16>, vector<16x256xbf16>, vector<8x256xf32> -> vector<8x256xf32>
    %c0_17 = arith.constant 0 : index
    %c0_18 = arith.constant 0 : index
    %25 = vector.load %arg8[%c0_17, %c0_18] : memref<1x256xf32, #tpu.memory_space<vmem>>, vector<1x256xf32>
    %26 = vector.broadcast %25 : vector<1x256xf32> to vector<8x256xf32>
    %27 = arith.addf %24, %26 : vector<8x256xf32>
    %cst_19 = arith.constant 0.000000e+00 : f32
    %28 = vector.broadcast %cst_19 : f32 to vector<8x256xf32>
    %29 = arith.maximumf %27, %28 : vector<8x256xf32>
    %30 = arith.truncf %29 : vector<8x256xf32> to vector<8x256xbf16>
    %c0_20 = arith.constant 0 : index
    %c0_21 = arith.constant 0 : index
    %31 = vector.load %arg9[%c0_20, %c0_21] : memref<256x896xbf16, #tpu.memory_space<vmem>>, vector<256x896xbf16>
    %cst_22 = arith.constant dense<0.000000e+00> : vector<8x896xf32>
    %32 = tpu.matmul %30, %31, %cst_22 {dimension_numbers = #tpu.dot_dimension_numbers<[1], [0], [0], [1], [0, 0, 1, 1], [], []>} : vector<8x256xbf16>, vector<256x896xbf16>, vector<8x896xf32> -> vector<8x896xf32>
    %c0_23 = arith.constant 0 : index
    %c0_24 = arith.constant 0 : index
    %33 = vector.load %arg10[%c0_23, %c0_24] : memref<1x896xf32, #tpu.memory_space<vmem>>, vector<1x896xf32>
    %34 = vector.broadcast %33 : vector<1x896xf32> to vector<8x896xf32>
    %35 = arith.addf %32, %34 : vector<8x896xf32>
    %cst_25 = arith.constant 0.000000e+00 : f32
    %36 = vector.broadcast %cst_25 : f32 to vector<8x896xf32>
    %37 = arith.subf %36, %35 : vector<8x896xf32>
    %38 = math.exp %37 : vector<8x896xf32>
    %cst_26 = arith.constant 1.000000e+00 : f32
    %39 = vector.broadcast %cst_26 : f32 to vector<8x896xf32>
    %40 = arith.addf %39, %38 : vector<8x896xf32>
    %41 = tpu.reciprocal %40 {approx = true} : vector<8x896xf32> -> vector<8x896xf32>
    %42 = arith.truncf %41 : vector<8x896xf32> to vector<8x896xbf16>
    %c0_27 = arith.constant 0 : index
    %c0_28 = arith.constant 0 : index
    %43 = vector.load %arg11[%c0_27, %c0_28] : memref<8x896xbf16, #tpu.memory_space<vmem>>, vector<8x896xbf16>
    tpu.vector_store %arg11[%c0_27, %c0_28], %42 {strides = array<i32>} : memref<8x896xbf16, #tpu.memory_space<vmem>>, vector<8x896xbf16>,
    %c0_29 = arith.constant 0 : index
    %c0_30 = arith.constant 0 : index
    %44 = vector.load %arg12[%c0_29, %c0_30] : memref<8x128xf32, #tpu.memory_space<vmem>>, vector<8x128xf32>
    tpu.vector_store %arg12[%c0_29, %c0_30], %13 {strides = array<i32>} : memref<8x128xf32, #tpu.memory_space<vmem>>, vector<8x128xf32>,
    return
  }
  func.func @transform_0(%arg0: i32) -> (i32, i32) {
    %c0_i32 = arith.constant 0 : i32
    %c0_i32_0 = arith.constant 0 : i32
    return %arg0, %c0_i32 : i32, i32
  }
  func.func @transform_1(%arg0: i32) -> (i32, i32) {
    %c0_i32 = arith.constant 0 : i32
    %c0_i32_0 = arith.constant 0 : i32
    %c0_i32_1 = arith.constant 0 : i32
    return %c0_i32, %c0_i32_0 : i32, i32
  }
  func.func @transform_2(%arg0: i32) -> (i32, i32) {
    %c0_i32 = arith.constant 0 : i32
    %c0_i32_0 = arith.constant 0 : i32
    %c0_i32_1 = arith.constant 0 : i32
    return %c0_i32, %c0_i32_0 : i32, i32
  }
  func.func @transform_3(%arg0: i32) -> (i32, i32) {
    %c0_i32 = arith.constant 0 : i32
    %c0_i32_0 = arith.constant 0 : i32
    %c0_i32_1 = arith.constant 0 : i32
    return %c0_i32, %c0_i32_0 : i32, i32
  }
  func.func @transform_4(%arg0: i32) -> (i32, i32) {
    %c0_i32 = arith.constant 0 : i32
    %c0_i32_0 = arith.constant 0 : i32
    %c0_i32_1 = arith.constant 0 : i32
    return %c0_i32, %c0_i32_0 : i32, i32
  }
  func.func @transform_5(%arg0: i32) -> (i32, i32) {
    %c0_i32 = arith.constant 0 : i32
    %c0_i32_0 = arith.constant 0 : i32
    return %arg0, %c0_i32 : i32, i32
  }
  func.func @transform_6(%arg0: i32) -> (i32, i32) {
    %c0_i32 = arith.constant 0 : i32
    %c0_i32_0 = arith.constant 0 : i32
    %c0_i32_1 = arith.constant 0 : i32
    return %c0_i32, %c0_i32_0 : i32, i32
  }
  func.func @transform_7(%arg0: i32) -> (i32, i32) {
    %c0_i32 = arith.constant 0 : i32
    %c0_i32_0 = arith.constant 0 : i32
    %c0_i32_1 = arith.constant 0 : i32
    return %c0_i32, %c0_i32_0 : i32, i32
  }
  func.func @transform_8(%arg0: i32) -> (i32, i32) {
    %c0_i32 = arith.constant 0 : i32
    %c0_i32_0 = arith.constant 0 : i32
    %c0_i32_1 = arith.constant 0 : i32
    return %c0_i32, %c0_i32_0 : i32, i32
  }
  func.func @transform_9(%arg0: i32) -> (i32, i32) {
    %c0_i32 = arith.constant 0 : i32
    %c0_i32_0 = arith.constant 0 : i32
    %c0_i32_1 = arith.constant 0 : i32
    return %c0_i32, %c0_i32_0 : i32, i32
  }
  func.func @transform_10(%arg0: i32) -> (i32, i32) {
    %c0_i32 = arith.constant 0 : i32
    %c0_i32_0 = arith.constant 0 : i32
    return %arg0, %c0_i32 : i32, i32
  }
  func.func @transform_11(%arg0: i32) -> (i32, i32) {
    %c0_i32 = arith.constant 0 : i32
    %c0_i32_0 = arith.constant 0 : i32
    return %arg0, %c0_i32 : i32, i32
  }
}

</mosaic_0001>

<llo_original>
// kernel: tpu_custom_call.1
$region0: #{tpu_custom_call.1}
  #allocation0 [shape = 'u32[]', space=smem, size = 0x4, offset = 0x4, fixed_abs, tag = 'smem constant byte address 0x4 - core index']
  #allocation1 [shape = 'u32[72,128]{1,0:T(1,128)}', space=vmem, size = 0x9000, scoped, tag = 'internal scratch']
  %s0 = inlined_call_operand.hbm [shape: bf16[8,896], index: 0, kind: input, shape index: {}]
  %s1 = inlined_call_operand.hbm [shape: bf16[896,256], index: 1, kind: input, shape index: {}]
  %s2 = inlined_call_operand.hbm [shape: f32[1,256], index: 2, kind: input, shape index: {}]
  %s3 = inlined_call_operand.hbm [shape: bf16[256,128], index: 3, kind: input, shape index: {}]
  %s4 = inlined_call_operand.vmem [shape: f32[1,128], index: 4, kind: input, shape index: {}]
  %s5 = inlined_call_operand.hbm [shape: f32[8,16], index: 5, kind: input, shape index: {}]
  %s6 = inlined_call_operand.hbm [shape: bf16[16,256], index: 6, kind: input, shape index: {}]
  %s7 = inlined_call_operand.hbm [shape: f32[1,256], index: 7, kind: input, shape index: {}]
  %s8 = inlined_call_operand.hbm [shape: bf16[256,896], index: 8, kind: input, shape index: {}]
  %s9 = inlined_call_operand.vmem [shape: f32[1,896], index: 9, kind: input, shape index: {}]
  %s10 = inlined_call_operand.hbm [shape: bf16[8,896], index: 10, kind: output, shape index: {0}]
  %s11 = inlined_call_operand.hbm [shape: f32[8,128], index: 11, kind: output, shape index: {1}]
  %12 = xla_tuple %s10, %s11
  %s13 = sld [smem:[#allocation0]]
  $region90: #{tpu_custom_call.1} parent=0
    _
  %s15 = ssub.s32 1, %s13
  %s16 = scalar_select 0, %s15, %s13
  $region1: #{tpu_custom_call.1} parent=0
    #allocation2 [shape = 'u8[14336]{0}', space=vmem, size = 0x3800, scoped, tag = 'input window, operand 0, single buffered']
    #allocation3 [shape = 's32[1]{0}', space=sflag, size = 0x4, scoped, tag = 'scoped memory for tpu_custom_call.1']
    #allocation4 [shape = 's32[1]{0}', space=sflag, size = 0x4, scoped, tag = 'scoped memory for tpu_custom_call.1']
    #allocation5 [shape = 'u8[458752]{0}', space=vmem, size = 0x70000, scoped, tag = 'input window, operand 1, single buffered']
    #allocation6 [shape = 's32[1]{0}', space=sflag, size = 0x4, scoped, tag = 'scoped memory for tpu_custom_call.1']
    #allocation7 [shape = 'u8[1024]{0}', space=vmem, size = 0x400, scoped, tag = 'input window, operand 2, single buffered']
    #allocation8 [shape = 'u8[65536]{0}', space=vmem, size = 0x10000, scoped, tag = 'input window, operand 3, single buffered']
    #allocation9 [shape = 's32[1]{0}', space=sflag, size = 0x4, scoped, tag = 'scoped memory for tpu_custom_call.1']
    #allocation10 [shape = 'u8[4096]{0}', space=vmem, size = 0x1000, scoped, tag = 'input window, operand 5, single buffered']
    #allocation11 [shape = 'u8[8192]{0}', space=vmem, size = 0x2000, scoped, tag = 'input window, operand 6, single buffered']
    #allocation12 [shape = 's32[1]{0}', space=sflag, size = 0x4, scoped, tag = 'scoped memory for tpu_custom_call.1']
    #allocation13 [shape = 'u8[1024]{0}', space=vmem, size = 0x400, scoped, tag = 'input window, operand 7, single buffered']
    #allocation14 [shape = 'u8[458752]{0}', space=vmem, size = 0x70000, scoped, tag = 'input window, operand 8, single buffered']
    #allocation15 [shape = 's32[1]{0}', space=sflag, size = 0x4, scoped, tag = 'scoped memory for tpu_custom_call.1']
    #allocation16 [shape = 'u8[14336]{0}', space=vmem, size = 0x3800, scoped, tag = 'output window, operand 0, single buffered']
    #allocation17 [shape = 'u8[4096]{0}', space=vmem, size = 0x1000, scoped, tag = 'output window, operand 1, single buffered']
    #allocation18 [shape = 's32[1]{0}', space=sflag, size = 0x4, scoped, tag = 'scoped memory for tpu_custom_call.1']
    %17 = vsyncpa [#allocation3], 0
    %18 = vsyncpa [#allocation6], 0
    %19 = vsyncpa [#allocation9], 0
    %20 = vsyncpa [#allocation12], 0
    %21 = vsyncpa [#allocation15], 0
    %22 = vsyncpa [#allocation4], 0
    %23 = vsyncpa [#allocation18], 0
    // Predicated region
    $region2: #{tpu_custom_call.1} parent=1 // pred_check
      _
    $region3: #{tpu_custom_call.1} parent=1 // pred_check_branch
      %25 = sbr.rel (0) target = $region5
    $region4: #{tpu_custom_call.1} parent=1 // pred_region
      %27 = vsyncadd [#allocation3], 0
      %s29 = sshll.u32 %s0, 4
      %s30 = int_to_ptr.hbm [resolvable:$true] %s29
      %s31 = sshll.u32 [#allocation2], 4
      %s32 = int_to_ptr.vmem [resolvable:$true] %s31
      %34 = dma.hbm_to_vmem [thread:$0]  %s30, 448, %s32, [#allocation3]
    $region5: #{tpu_custom_call.1} parent=1 // pred_fallthru
      _
    // Predicated region
    $region6: #{tpu_custom_call.1} parent=1 // pred_check
      _
    $region7: #{tpu_custom_call.1} parent=1 // pred_check_branch
      %36 = sbr.rel (0) target = $region9
    $region8: #{tpu_custom_call.1} parent=1 // pred_region
      %38 = vsyncadd [#allocation6], 0
      %s39 = sshll.u32 %s1, 4
      %s40 = int_to_ptr.hbm [resolvable:$true] %s39
      %s41 = sshll.u32 [#allocation5], 4
      %s42 = int_to_ptr.vmem [resolvable:$true] %s41
      %47 = dma.hbm_to_vmem [thread:$0]  %s40, 14336, %s42, [#allocation6], 128, 128, 8
    $region9: #{tpu_custom_call.1} parent=1 // pred_fallthru
      _
    // Predicated region
    $region10: #{tpu_custom_call.1} parent=1 // pred_check
      _
    $region11: #{tpu_custom_call.1} parent=1 // pred_check_branch
      %49 = sbr.rel (0) target = $region13
    $region12: #{tpu_custom_call.1} parent=1 // pred_region
      %51 = vsyncadd [#allocation6], 0
      %s53 = sshll.u32 %s2, 4
      %s54 = int_to_ptr.hbm [resolvable:$true] %s53
      %s55 = sshll.u32 [#allocation7], 4
      %s56 = int_to_ptr.vmem [resolvable:$true] %s55
      %58 = dma.hbm_to_vmem [thread:$0]  %s54, 32, %s56, [#allocation6]
    $region13: #{tpu_custom_call.1} parent=1 // pred_fallthru
      _
    // Predicated region
    $region14: #{tpu_custom_call.1} parent=1 // pred_check
      _
    $region15: #{tpu_custom_call.1} parent=1 // pred_check_branch
      %60 = sbr.rel (0) target = $region17
    $region16: #{tpu_custom_call.1} parent=1 // pred_region
      %62 = vsyncadd [#allocation9], 0
      %s63 = sshll.u32 %s3, 4
      %s64 = int_to_ptr.hbm [resolvable:$true] %s63
      %s65 = sshll.u32 [#allocation8], 4
      %s66 = int_to_ptr.vmem [resolvable:$true] %s65
      %71 = dma.hbm_to_vmem [thread:$0]  %s64, 2048, %s66, [#allocation9], 64, 64, 4
    $region17: #{tpu_custom_call.1} parent=1 // pred_fallthru
      _
    // Predicated region
    $region18: #{tpu_custom_call.1} parent=1 // pred_check
      _
    $region19: #{tpu_custom_call.1} parent=1 // pred_check_branch
      %73 = sbr.rel (0) target = $region21
    $region20: #{tpu_custom_call.1} parent=1 // pred_region
      _
    $region21: #{tpu_custom_call.1} parent=1 // pred_fallthru
      _
    // Predicated region
    $region22: #{tpu_custom_call.1} parent=1 // pred_check
      _
    $region23: #{tpu_custom_call.1} parent=1 // pred_check_branch
      %75 = sbr.rel (0) target = $region25
    $region24: #{tpu_custom_call.1} parent=1 // pred_region
      %77 = vsyncadd [#allocation9], 0
      %s79 = sshll.u32 %s5, 4
      %s80 = int_to_ptr.hbm [resolvable:$true] %s79
      %s81 = sshll.u32 [#allocation10], 4
      %s82 = int_to_ptr.vmem [resolvable:$true] %s81
      %84 = dma.hbm_to_vmem [thread:$0]  %s80, 128, %s82, [#allocation9]
    $region25: #{tpu_custom_call.1} parent=1 // pred_fallthru
      _
    // Predicated region
    $region26: #{tpu_custom_call.1} parent=1 // pred_check
      _
    $region27: #{tpu_custom_call.1} parent=1 // pred_check_branch
      %86 = sbr.rel (0) target = $region29
    $region28: #{tpu_custom_call.1} parent=1 // pred_region
      %88 = vsyncadd [#allocation12], 0
      %s89 = sshll.u32 %s6, 4
      %s90 = int_to_ptr.hbm [resolvable:$true] %s89
      %s91 = sshll.u32 [#allocation11], 4
      %s92 = int_to_ptr.vmem [resolvable:$true] %s91
      %97 = dma.hbm_to_vmem [thread:$0]  %s90, 256, %s92, [#allocation12], 128, 128, 8
    $region29: #{tpu_custom_call.1} parent=1 // pred_fallthru
      _
    // Predicated region
    $region30: #{tpu_custom_call.1} parent=1 // pred_check
      _
    $region31: #{tpu_custom_call.1} parent=1 // pred_check_branch
      %99 = sbr.rel (0) target = $region33
    $region32: #{tpu_custom_call.1} parent=1 // pred_region
      %101 = vsyncadd [#allocation12], 0
      %s103 = sshll.u32 %s7, 4
      %s104 = int_to_ptr.hbm [resolvable:$true] %s103
      %s105 = sshll.u32 [#allocation13], 4
      %s106 = int_to_ptr.vmem [resolvable:$true] %s105
      %108 = dma.hbm_to_vmem [thread:$0]  %s104, 32, %s106, [#allocation12]
    $region33: #{tpu_custom_call.1} parent=1 // pred_fallthru
      _
    // Predicated region
    $region34: #{tpu_custom_call.1} parent=1 // pred_check
      _
    $region35: #{tpu_custom_call.1} parent=1 // pred_check_branch
      %110 = sbr.rel (0) target = $region37
    $region36: #{tpu_custom_call.1} parent=1 // pred_region
      %112 = vsyncadd [#allocation15], 0
      %s113 = sshll.u32 %s8, 4
      %s114 = int_to_ptr.hbm [resolvable:$true] %s113
      %s115 = sshll.u32 [#allocation14], 4
      %s116 = int_to_ptr.vmem [resolvable:$true] %s115
      %121 = dma.hbm_to_vmem [thread:$0]  %s114, 14336, %s116, [#allocation15], 448, 448, 28
    $region37: #{tpu_custom_call.1} parent=1 // pred_fallthru
      _
    // Predicated region
    $region38: #{tpu_custom_call.1} parent=1 // pred_check
      _
    $region39: #{tpu_custom_call.1} parent=1 // pred_check_branch
      %123 = sbr.rel (0) target = $region41
    $region40: #{tpu_custom_call.1} parent=1 // pred_region
      _
    $region41: #{tpu_custom_call.1} parent=1 // pred_fallthru
      _
    // Predicated region
    $region42: #{tpu_custom_call.1} parent=1 // pred_check
      _
    $region43: #{tpu_custom_call.1} parent=1 // pred_check_branch
      %125 = sbr.rel (0) target = $region45
    $region44: #{tpu_custom_call.1} parent=1 // pred_region
      %127 = dma.done [#allocation3], 448
    $region45: #{tpu_custom_call.1} parent=1 // pred_fallthru
      _
    // Predicated region
    $region46: #{tpu_custom_call.1} parent=1 // pred_check
      _
    $region47: #{tpu_custom_call.1} parent=1 // pred_check_branch
      %129 = sbr.rel (0) target = $region49
    $region48: #{tpu_custom_call.1} parent=1 // pred_region
      %131 = dma.done [#allocation6], 14336
    $region49: #{tpu_custom_call.1} parent=1 // pred_fallthru
      _
    // Predicated region
    $region50: #{tpu_custom_call.1} parent=1 // pred_check
      _
    $region51: #{tpu_custom_call.1} parent=1 // pred_check_branch
      %133 = sbr.rel (0) target = $region53
    $region52: #{tpu_custom_call.1} parent=1 // pred_region
      %135 = dma.done [#allocation6], 32
    $region53: #{tpu_custom_call.1} parent=1 // pred_fallthru
      _
    // Predicated region
    $region54: #{tpu_custom_call.1} parent=1 // pred_check
      _
    $region55: #{tpu_custom_call.1} parent=1 // pred_check_branch
      %137 = sbr.rel (0) target = $region57
    $region56: #{tpu_custom_call.1} parent=1 // pred_region
      %139 = dma.done [#allocation9], 2048
    $region57: #{tpu_custom_call.1} parent=1 // pred_fallthru
      _
    // Predicated region
    $region58: #{tpu_custom_call.1} parent=1 // pred_check
      _
    $region59: #{tpu_custom_call.1} parent=1 // pred_check_branch
      %141 = sbr.rel (0) target = $region61
    $region60: #{tpu_custom_call.1} parent=1 // pred_region
      %143 = dma.done [#allocation9], 128
    $region61: #{tpu_custom_call.1} parent=1 // pred_fallthru
      _
    // Predicated region
    $region62: #{tpu_custom_call.1} parent=1 // pred_check
      _
    $region63: #{tpu_custom_call.1} parent=1 // pred_check_branch
      %145 = sbr.rel (0) target = $region65
    $region64: #{tpu_custom_call.1} parent=1 // pred_region
      %147 = dma.done [#allocation12], 256
    $region65: #{tpu_custom_call.1} parent=1 // pred_fallthru
      _
    // Predicated region
    $region66: #{tpu_custom_call.1} parent=1 // pred_check
      _
    $region67: #{tpu_custom_call.1} parent=1 // pred_check_branch
      %149 = sbr.rel (0) target = $region69
    $region68: #{tpu_custom_call.1} parent=1 // pred_region
      %151 = dma.done [#allocation12], 32
    $region69: #{tpu_custom_call.1} parent=1 // pred_fallthru
      _
    // Predicated region
    $region70: #{tpu_custom_call.1} parent=1 // pred_check
      _
    $region71: #{tpu_custom_call.1} parent=1 // pred_check_branch
      %153 = sbr.rel (0) target = $region73
    $region72: #{tpu_custom_call.1} parent=1 // pred_region
      %155 = dma.done [#allocation15], 14336
    $region73: #{tpu_custom_call.1} parent=1 // pred_fallthru
      _
    %v157 = vld [vmem:[#allocation2] sm:$0xff]
    %v158 = vld [vmem:[#allocation2 + $0x8] sm:$0xff]
    %v159 = vld [vmem:[#allocation2 + $0x10] sm:$0xff]
    %v160 = vld [vmem:[#allocation2 + $0x18] sm:$0xf]
    %v161 = vld [vmem:[#allocation5] sm:$0xff]
    %v162 = vld [vmem:[#allocation5 + $0x8] sm:$0xff]
    %v163 = vld [vmem:[#allocation5 + $0x10] sm:$0xff]
    %v164 = vld [vmem:[#allocation5 + $0x18] sm:$0xff]
    %v165 = vld [vmem:[#allocation5 + $0x20] sm:$0xff]
    %v166 = vld [vmem:[#allocation5 + $0x28] sm:$0xff]
    %v167 = vld [vmem:[#allocation5 + $0x30] sm:$0xff]
    %v168 = vld [vmem:[#allocation5 + $0x38] sm:$0xff]
    %v169 = vld [vmem:[#allocation5 + $0x40] sm:$0xff]
    %v170 = vld [vmem:[#allocation5 + $0x48] sm:$0xff]
    %v171 = vld [vmem:[#allocation5 + $0x50] sm:$0xff]
    %v172 = vld [vmem:[#allocation5 + $0x58] sm:$0xff]
    %v173 = vld [vmem:[#allocation5 + $0x60] sm:$0xff]
    %v174 = vld [vmem:[#allocation5 + $0x68] sm:$0xff]
    %v175 = vld [vmem:[#allocation5 + $0x70] sm:$0xff]
    %v176 = vld [vmem:[#allocation5 + $0x78] sm:$0xff]
    %v177 = vld [vmem:[#allocation5 + $0x80] sm:$0xff]
    %v178 = vld [vmem:[#allocation5 + $0x88] sm:$0xff]
    %v179 = vld [vmem:[#allocation5 + $0x90] sm:$0xff]
    %v180 = vld [vmem:[#allocation5 + $0x98] sm:$0xff]
    %v181 = vld [vmem:[#allocation5 + $0xa0] sm:$0xff]
    %v182 = vld [vmem:[#allocation5 + $0xa8] sm:$0xff]
    %v183 = vld [vmem:[#allocation5 + $0xb0] sm:$0xff]
    %v184 = vld [vmem:[#allocation5 + $0xb8] sm:$0xff]
    %v185 = vld [vmem:[#allocation5 + $0xc0] sm:$0xff]
    %v186 = vld [vmem:[#allocation5 + $0xc8] sm:$0xff]
    %v187 = vld [vmem:[#allocation5 + $0xd0] sm:$0xff]
    %v188 = vld [vmem:[#allocation5 + $0xd8] sm:$0xff]
    %v189 = vld [vmem:[#allocation5 + $0xe0] sm:$0xff]
    %v190 = vld [vmem:[#allocation5 + $0xe8] sm:$0xff]
    %v191 = vld [vmem:[#allocation5 + $0xf0] sm:$0xff]
    %v192 = vld [vmem:[#allocation5 + $0xf8] sm:$0xff]
    %v193 = vld [vmem:[#allocation5 + $0x100] sm:$0xff]
    %v194 = vld [vmem:[#allocation5 + $0x108] sm:$0xff]
    %v195 = vld [vmem:[#allocation5 + $0x110] sm:$0xff]
    %v196 = vld [vmem:[#allocation5 + $0x118] sm:$0xff]
    %v197 = vld [vmem:[#allocation5 + $0x120] sm:$0xff]
    %v198 = vld [vmem:[#allocation5 + $0x128] sm:$0xff]
    %v199 = vld [vmem:[#allocation5 + $0x130] sm:$0xff]
    %v200 = vld [vmem:[#allocation5 + $0x138] sm:$0xff]
    %v201 = vld [vmem:[#allocation5 + $0x140] sm:$0xff]
    %v202 = vld [vmem:[#allocation5 + $0x148] sm:$0xff]
    %v203 = vld [vmem:[#allocation5 + $0x150] sm:$0xff]
    %v204 = vld [vmem:[#allocation5 + $0x158] sm:$0xff]
    %v205 = vld [vmem:[#allocation5 + $0x160] sm:$0xff]
    %v206 = vld [vmem:[#allocation5 + $0x168] sm:$0xff]
    %v207 = vld [vmem:[#allocation5 + $0x170] sm:$0xff]
    %v208 = vld [vmem:[#allocation5 + $0x178] sm:$0xff]
    %v209 = vld [vmem:[#allocation5 + $0x180] sm:$0xff]
    %v210 = vld [vmem:[#allocation5 + $0x188] sm:$0xff]
    %v211 = vld [vmem:[#allocation5 + $0x190] sm:$0xff]
    %v212 = vld [vmem:[#allocation5 + $0x198] sm:$0xff]
    %v213 = vld [vmem:[#allocation5 + $0x1a0] sm:$0xff]
    %v214 = vld [vmem:[#allocation5 + $0x1a8] sm:$0xff]
    %v215 = vld [vmem:[#allocation5 + $0x1b0] sm:$0xff]
    %v216 = vld [vmem:[#allocation5 + $0x1b8] sm:$0xff]
    %v217 = vld [vmem:[#allocation5 + $0x1c0] sm:$0xff]
    %v218 = vld [vmem:[#allocation5 + $0x1c8] sm:$0xff]
    %v219 = vld [vmem:[#allocation5 + $0x1d0] sm:$0xff]
    %v220 = vld [vmem:[#allocation5 + $0x1d8] sm:$0xff]
    %v221 = vld [vmem:[#allocation5 + $0x1e0] sm:$0xff]
    %v222 = vld [vmem:[#allocation5 + $0x1e8] sm:$0xff]
    %v223 = vld [vmem:[#allocation5 + $0x1f0] sm:$0xff]
    %v224 = vld [vmem:[#allocation5 + $0x1f8] sm:$0xff]
    %v225 = vld [vmem:[#allocation5 + $0x200] sm:$0xff]
    %v226 = vld [vmem:[#allocation5 + $0x208] sm:$0xff]
    %v227 = vld [vmem:[#allocation5 + $0x210] sm:$0xff]
    %v228 = vld [vmem:[#allocation5 + $0x218] sm:$0xff]
    %v229 = vld [vmem:[#allocation5 + $0x220] sm:$0xff]
    %v230 = vld [vmem:[#allocation5 + $0x228] sm:$0xff]
    %v231 = vld [vmem:[#allocation5 + $0x230] sm:$0xff]
    %v232 = vld [vmem:[#allocation5 + $0x238] sm:$0xff]
    %v233 = vld [vmem:[#allocation5 + $0x240] sm:$0xff]
    %v234 = vld [vmem:[#allocation5 + $0x248] sm:$0xff]
    %v235 = vld [vmem:[#allocation5 + $0x250] sm:$0xff]
    %v236 = vld [vmem:[#allocation5 + $0x258] sm:$0xff]
    %v237 = vld [vmem:[#allocation5 + $0x260] sm:$0xff]
    %v238 = vld [vmem:[#allocation5 + $0x268] sm:$0xff]
    %v239 = vld [vmem:[#allocation5 + $0x270] sm:$0xff]
    %v240 = vld [vmem:[#allocation5 + $0x278] sm:$0xff]
    %v241 = vld [vmem:[#allocation5 + $0x280] sm:$0xff]
    %v242 = vld [vmem:[#allocation5 + $0x288] sm:$0xff]
    %v243 = vld [vmem:[#allocation5 + $0x290] sm:$0xff]
    %v244 = vld [vmem:[#allocation5 + $0x298] sm:$0xff]
    %v245 = vld [vmem:[#allocation5 + $0x2a0] sm:$0xff]
    %v246 = vld [vmem:[#allocation5 + $0x2a8] sm:$0xff]
    %v247 = vld [vmem:[#allocation5 + $0x2b0] sm:$0xff]
    %v248 = vld [vmem:[#allocation5 + $0x2b8] sm:$0xff]
    %v249 = vld [vmem:[#allocation5 + $0x2c0] sm:$0xff]
    %v250 = vld [vmem:[#allocation5 + $0x2c8] sm:$0xff]
    %v251 = vld [vmem:[#allocation5 + $0x2d0] sm:$0xff]
    %v252 = vld [vmem:[#allocation5 + $0x2d8] sm:$0xff]
    %v253 = vld [vmem:[#allocation5 + $0x2e0] sm:$0xff]
    %v254 = vld [vmem:[#allocation5 + $0x2e8] sm:$0xff]
    %v255 = vld [vmem:[#allocation5 + $0x2f0] sm:$0xff]
    %v256 = vld [vmem:[#allocation5 + $0x2f8] sm:$0xff]
    %v257 = vld [vmem:[#allocation5 + $0x300] sm:$0xff]
    %v258 = vld [vmem:[#allocation5 + $0x308] sm:$0xff]
    %v259 = vld [vmem:[#allocation5 + $0x310] sm:$0xff]
    %v260 = vld [vmem:[#allocation5 + $0x318] sm:$0xff]
    %v261 = vld [vmem:[#allocation5 + $0x320] sm:$0xff]
    %v262 = vld [vmem:[#allocation5 + $0x328] sm:$0xff]
    %v263 = vld [vmem:[#allocation5 + $0x330] sm:$0xff]
    %v264 = vld [vmem:[#allocation5 + $0x338] sm:$0xff]
    %v265 = vld [vmem:[#allocation5 + $0x340] sm:$0xff]
    %v266 = vld [vmem:[#allocation5 + $0x348] sm:$0xff]
    %v267 = vld [vmem:[#allocation5 + $0x350] sm:$0xff]
    %v268 = vld [vmem:[#allocation5 + $0x358] sm:$0xff]
    %v269 = vld [vmem:[#allocation5 + $0x360] sm:$0xff]
    %v270 = vld [vmem:[#allocation5 + $0x368] sm:$0xff]
    %v271 = vld [vmem:[#allocation5 + $0x370] sm:$0xff]
    %v272 = vld [vmem:[#allocation5 + $0x378] sm:$0xff]
    %v273 = vld [vmem:[#allocation7] sm:$0x3]
    %v275 = vperm.slane %v273, 0
    %v276 = vperm.slane %v273, 1
    %v283 = vunpack.c.l.b16 %v157
    %v284 = vunpack.c.h.b16 %v157
    %v285 = vunpack.c.l.b16 %v158
    %v286 = vunpack.c.h.b16 %v158
    %v287 = vunpack.c.l.b16 %v159
    %v288 = vunpack.c.h.b16 %v159
    %v289 = vunpack.c.l.b16 %v160
    %v290 = vpack.c.b16 %v283, %v283
    %v291 = vpack.c.b16 %v284, %v284
    %v292 = vpack.c.b16 %v285, %v285
    %v293 = vpack.c.b16 %v286, %v286
    %v294 = vpack.c.b16 %v287, %v287
    %v295 = vpack.c.b16 %v288, %v288
    %v296 = vpack.c.b16 %v289, %v289
    %v416 = vunpack.c.l.b16 %v161
    %v417 = vunpack.c.h.b16 %v161
    %v418 = vunpack.c.l.b16 %v162
    %v419 = vunpack.c.h.b16 %v162
    %v420 = vunpack.c.l.b16 %v163
    %v421 = vunpack.c.h.b16 %v163
    %v422 = vunpack.c.l.b16 %v164
    %v423 = vunpack.c.h.b16 %v164
    %v424 = vunpack.c.l.b16 %v165
    %v425 = vunpack.c.h.b16 %v165
    %v426 = vunpack.c.l.b16 %v166
    %v427 = vunpack.c.h.b16 %v166
    %v428 = vunpack.c.l.b16 %v167
    %v429 = vunpack.c.h.b16 %v167
    %v430 = vunpack.c.l.b16 %v168
    %v431 = vunpack.c.h.b16 %v168
    %v432 = vunpack.c.l.b16 %v169
    %v433 = vunpack.c.h.b16 %v169
    %v434 = vunpack.c.l.b16 %v170
    %v435 = vunpack.c.h.b16 %v170
    %v436 = vunpack.c.l.b16 %v171
    %v437 = vunpack.c.h.b16 %v171
    %v438 = vunpack.c.l.b16 %v172
    %v439 = vunpack.c.h.b16 %v172
    %v440 = vunpack.c.l.b16 %v173
    %v441 = vunpack.c.h.b16 %v173
    %v442 = vunpack.c.l.b16 %v174
    %v443 = vunpack.c.h.b16 %v174
    %v444 = vunpack.c.l.b16 %v175
    %v445 = vunpack.c.h.b16 %v175
    %v446 = vunpack.c.l.b16 %v176
    %v447 = vunpack.c.h.b16 %v176
    %v448 = vunpack.c.l.b16 %v177
    %v449 = vunpack.c.h.b16 %v177
    %v450 = vunpack.c.l.b16 %v178
    %v451 = vunpack.c.h.b16 %v178
    %v452 = vunpack.c.l.b16 %v179
    %v453 = vunpack.c.h.b16 %v179
    %v454 = vunpack.c.l.b16 %v180
    %v455 = vunpack.c.h.b16 %v180
    %v456 = vunpack.c.l.b16 %v181
    %v457 = vunpack.c.h.b16 %v181
    %v458 = vunpack.c.l.b16 %v182
    %v459 = vunpack.c.h.b16 %v182
    %v460 = vunpack.c.l.b16 %v183
    %v461 = vunpack.c.h.b16 %v183
    %v462 = vunpack.c.l.b16 %v184
    %v463 = vunpack.c.h.b16 %v184
    %v464 = vunpack.c.l.b16 %v185
    %v465 = vunpack.c.h.b16 %v185
    %v466 = vunpack.c.l.b16 %v186
    %v467 = vunpack.c.h.b16 %v186
    %v468 = vunpack.c.l.b16 %v187
    %v469 = vunpack.c.h.b16 %v187
    %v470 = vunpack.c.l.b16 %v188
    %v471 = vunpack.c.h.b16 %v188
    %v472 = vunpack.c.l.b16 %v189
    %v473 = vunpack.c.h.b16 %v189
    %v474 = vunpack.c.l.b16 %v190
    %v475 = vunpack.c.h.b16 %v190
    %v476 = vunpack.c.l.b16 %v191
    %v477 = vunpack.c.h.b16 %v191
    %v478 = vunpack.c.l.b16 %v192
    %v479 = vunpack.c.h.b16 %v192
    %v480 = vunpack.c.l.b16 %v193
    %v481 = vunpack.c.h.b16 %v193
    %v482 = vunpack.c.l.b16 %v194
    %v483 = vunpack.c.h.b16 %v194
    %v484 = vunpack.c.l.b16 %v195
    %v485 = vunpack.c.h.b16 %v195
    %v486 = vunpack.c.l.b16 %v196
    %v487 = vunpack.c.h.b16 %v196
    %v488 = vunpack.c.l.b16 %v197
    %v489 = vunpack.c.h.b16 %v197
    %v490 = vunpack.c.l.b16 %v198
    %v491 = vunpack.c.h.b16 %v198
    %v492 = vunpack.c.l.b16 %v199
    %v493 = vunpack.c.h.b16 %v199
    %v494 = vunpack.c.l.b16 %v200
    %v495 = vunpack.c.h.b16 %v200
    %v496 = vunpack.c.l.b16 %v201
    %v497 = vunpack.c.h.b16 %v201
    %v498 = vunpack.c.l.b16 %v202
    %v499 = vunpack.c.h.b16 %v202
    %v500 = vunpack.c.l.b16 %v203
    %v501 = vunpack.c.h.b16 %v203
    %v502 = vunpack.c.l.b16 %v204
    %v503 = vunpack.c.h.b16 %v204
    %v504 = vunpack.c.l.b16 %v205
    %v505 = vunpack.c.h.b16 %v205
    %v506 = vunpack.c.l.b16 %v206
    %v507 = vunpack.c.h.b16 %v206
    %v508 = vunpack.c.l.b16 %v207
    %v509 = vunpack.c.h.b16 %v207
    %v510 = vunpack.c.l.b16 %v208
    %v511 = vunpack.c.h.b16 %v208
    %v512 = vunpack.c.l.b16 %v209
    %v513 = vunpack.c.h.b16 %v209
    %v514 = vunpack.c.l.b16 %v210
    %v515 = vunpack.c.h.b16 %v210
    %v516 = vunpack.c.l.b16 %v211
    %v517 = vunpack.c.h.b16 %v211
    %v518 = vunpack.c.l.b16 %v212
    %v519 = vunpack.c.h.b16 %v212
    %v520 = vunpack.c.l.b16 %v213
    %v521 = vunpack.c.h.b16 %v213
    %v522 = vunpack.c.l.b16 %v214
    %v523 = vunpack.c.h.b16 %v214
    %v524 = vunpack.c.l.b16 %v215
    %v525 = vunpack.c.h.b16 %v215
    %v526 = vunpack.c.l.b16 %v216
    %v527 = vunpack.c.h.b16 %v216
    %v528 = vunpack.c.l.b16 %v217
    %v529 = vunpack.c.h.b16 %v217
    %v530 = vunpack.c.l.b16 %v218
    %v531 = vunpack.c.h.b16 %v218
    %v532 = vunpack.c.l.b16 %v219
    %v533 = vunpack.c.h.b16 %v219
    %v534 = vunpack.c.l.b16 %v220
    %v535 = vunpack.c.h.b16 %v220
    %v536 = vunpack.c.l.b16 %v221
    %v537 = vunpack.c.h.b16 %v221
    %v538 = vunpack.c.l.b16 %v222
    %v539 = vunpack.c.h.b16 %v222
    %v540 = vunpack.c.l.b16 %v223
    %v541 = vunpack.c.h.b16 %v223
    %v542 = vunpack.c.l.b16 %v224
    %v543 = vunpack.c.h.b16 %v224
    %v544 = vunpack.c.l.b16 %v225
    %v545 = vunpack.c.h.b16 %v225
    %v546 = vunpack.c.l.b16 %v226
    %v547 = vunpack.c.h.b16 %v226
    %v548 = vunpack.c.l.b16 %v227
    %v549 = vunpack.c.h.b16 %v227
    %v550 = vunpack.c.l.b16 %v228
    %v551 = vunpack.c.h.b16 %v228
    %v552 = vunpack.c.l.b16 %v229
    %v553 = vunpack.c.h.b16 %v229
    %v554 = vunpack.c.l.b16 %v230
    %v555 = vunpack.c.h.b16 %v230
    %v556 = vunpack.c.l.b16 %v231
    %v557 = vunpack.c.h.b16 %v231
    %v558 = vunpack.c.l.b16 %v232
    %v559 = vunpack.c.h.b16 %v232
    %v560 = vunpack.c.l.b16 %v233
    %v561 = vunpack.c.h.b16 %v233
    %v562 = vunpack.c.l.b16 %v234
    %v563 = vunpack.c.h.b16 %v234
    %v564 = vunpack.c.l.b16 %v235
    %v565 = vunpack.c.h.b16 %v235
    %v566 = vunpack.c.l.b16 %v236
    %v567 = vunpack.c.h.b16 %v236
    %v568 = vunpack.c.l.b16 %v237
    %v569 = vunpack.c.h.b16 %v237
    %v570 = vunpack.c.l.b16 %v238
    %v571 = vunpack.c.h.b16 %v238
    %v572 = vunpack.c.l.b16 %v239
    %v573 = vunpack.c.h.b16 %v239
    %v574 = vunpack.c.l.b16 %v240
    %v575 = vunpack.c.h.b16 %v240
    %v576 = vunpack.c.l.b16 %v241
    %v577 = vunpack.c.h.b16 %v241
    %v578 = vunpack.c.l.b16 %v242
    %v579 = vunpack.c.h.b16 %v242
    %v580 = vunpack.c.l.b16 %v243
    %v581 = vunpack.c.h.b16 %v243
    %v582 = vunpack.c.l.b16 %v244
    %v583 = vunpack.c.h.b16 %v244
    %v584 = vunpack.c.l.b16 %v245
    %v585 = vunpack.c.h.b16 %v245
    %v586 = vunpack.c.l.b16 %v246
    %v587 = vunpack.c.h.b16 %v246
    %v588 = vunpack.c.l.b16 %v247
    %v589 = vunpack.c.h.b16 %v247
    %v590 = vunpack.c.l.b16 %v248
    %v591 = vunpack.c.h.b16 %v248
    %v592 = vunpack.c.l.b16 %v249
    %v593 = vunpack.c.h.b16 %v249
    %v594 = vunpack.c.l.b16 %v250
    %v595 = vunpack.c.h.b16 %v250
    %v596 = vunpack.c.l.b16 %v251
    %v597 = vunpack.c.h.b16 %v251
    %v598 = vunpack.c.l.b16 %v252
    %v599 = vunpack.c.h.b16 %v252
    %v600 = vunpack.c.l.b16 %v253
    %v601 = vunpack.c.h.b16 %v253
    %v602 = vunpack.c.l.b16 %v254
    %v603 = vunpack.c.h.b16 %v254
    %v604 = vunpack.c.l.b16 %v255
    %v605 = vunpack.c.h.b16 %v255
    %v606 = vunpack.c.l.b16 %v256
    %v607 = vunpack.c.h.b16 %v256
    %v608 = vunpack.c.l.b16 %v257
    %v609 = vunpack.c.h.b16 %v257
    %v610 = vunpack.c.l.b16 %v258
    %v611 = vunpack.c.h.b16 %v258
    %v612 = vunpack.c.l.b16 %v259
    %v613 = vunpack.c.h.b16 %v259
    %v614 = vunpack.c.l.b16 %v260
    %v615 = vunpack.c.h.b16 %v260
    %v616 = vunpack.c.l.b16 %v261
    %v617 = vunpack.c.h.b16 %v261
    %v618 = vunpack.c.l.b16 %v262
    %v619 = vunpack.c.h.b16 %v262
    %v620 = vunpack.c.l.b16 %v263
    %v621 = vunpack.c.h.b16 %v263
    %v622 = vunpack.c.l.b16 %v264
    %v623 = vunpack.c.h.b16 %v264
    %v624 = vunpack.c.l.b16 %v265
    %v625 = vunpack.c.h.b16 %v265
    %v626 = vunpack.c.l.b16 %v266
    %v627 = vunpack.c.h.b16 %v266
    %v628 = vunpack.c.l.b16 %v267
    %v629 = vunpack.c.h.b16 %v267
    %v630 = vunpack.c.l.b16 %v268
    %v631 = vunpack.c.h.b16 %v268
    %v632 = vunpack.c.l.b16 %v269
    %v633 = vunpack.c.h.b16 %v269
    %v634 = vunpack.c.l.b16 %v270
    %v635 = vunpack.c.h.b16 %v270
    %v636 = vunpack.c.l.b16 %v271
    %v637 = vunpack.c.h.b16 %v271
    %v638 = vunpack.c.l.b16 %v272
    %v639 = vunpack.c.h.b16 %v272
    %v640 = vpack.c.b16 %v418, %v416
    %v641 = vpack.c.b16 %v419, %v417
    %v642 = vpack.c.b16 %v422, %v420
    %v643 = vpack.c.b16 %v423, %v421
    %v644 = vpack.c.b16 %v426, %v424
    %v645 = vpack.c.b16 %v427, %v425
    %v646 = vpack.c.b16 %v430, %v428
    %v647 = vpack.c.b16 %v431, %v429
    %v648 = vpack.c.b16 %v434, %v432
    %v649 = vpack.c.b16 %v435, %v433
    %v650 = vpack.c.b16 %v438, %v436
    %v651 = vpack.c.b16 %v439, %v437
    %v652 = vpack.c.b16 %v442, %v440
    %v653 = vpack.c.b16 %v443, %v441
    %v654 = vpack.c.b16 %v446, %v444
    %v655 = vpack.c.b16 %v447, %v445
    %v656 = vpack.c.b16 %v450, %v448
    %v657 = vpack.c.b16 %v451, %v449
    %v658 = vpack.c.b16 %v454, %v452
    %v659 = vpack.c.b16 %v455, %v453
    %v660 = vpack.c.b16 %v458, %v456
    %v661 = vpack.c.b16 %v459, %v457
    %v662 = vpack.c.b16 %v462, %v460
    %v663 = vpack.c.b16 %v463, %v461
    %v664 = vpack.c.b16 %v466, %v464
    %v665 = vpack.c.b16 %v467, %v465
    %v666 = vpack.c.b16 %v470, %v468
    %v667 = vpack.c.b16 %v471, %v469
    %v668 = vpack.c.b16 %v474, %v472
    %v669 = vpack.c.b16 %v475, %v473
    %v670 = vpack.c.b16 %v478, %v476
    %v671 = vpack.c.b16 %v479, %v477
    %v672 = vpack.c.b16 %v482, %v480
    %v673 = vpack.c.b16 %v483, %v481
    %v674 = vpack.c.b16 %v486, %v484
    %v675 = vpack.c.b16 %v487, %v485
    %v676 = vpack.c.b16 %v490, %v488
    %v677 = vpack.c.b16 %v491, %v489
    %v678 = vpack.c.b16 %v494, %v492
    %v679 = vpack.c.b16 %v495, %v493
    %v680 = vpack.c.b16 %v498, %v496
    %v681 = vpack.c.b16 %v499, %v497
    %v682 = vpack.c.b16 %v502, %v500
    %v683 = vpack.c.b16 %v503, %v501
    %v684 = vpack.c.b16 %v506, %v504
    %v685 = vpack.c.b16 %v507, %v505
    %v686 = vpack.c.b16 %v510, %v508
    %v687 = vpack.c.b16 %v511, %v509
    %v688 = vpack.c.b16 %v514, %v512
    %v689 = vpack.c.b16 %v515, %v513
    %v690 = vpack.c.b16 %v518, %v516
    %v691 = vpack.c.b16 %v519, %v517
    %v692 = vpack.c.b16 %v522, %v520
    %v693 = vpack.c.b16 %v523, %v521
    %v694 = vpack.c.b16 %v526, %v524
    %v695 = vpack.c.b16 %v527, %v525
    %v696 = vpack.c.b16 %v530, %v528
    %v697 = vpack.c.b16 %v531, %v529
    %v698 = vpack.c.b16 %v534, %v532
    %v699 = vpack.c.b16 %v535, %v533
    %v700 = vpack.c.b16 %v538, %v536
    %v701 = vpack.c.b16 %v539, %v537
    %v702 = vpack.c.b16 %v542, %v540
    %v703 = vpack.c.b16 %v543, %v541
    %v704 = vpack.c.b16 %v546, %v544
    %v705 = vpack.c.b16 %v547, %v545
    %v706 = vpack.c.b16 %v550, %v548
    %v707 = vpack.c.b16 %v551, %v549
    %v708 = vpack.c.b16 %v554, %v552
    %v709 = vpack.c.b16 %v555, %v553
    %v710 = vpack.c.b16 %v558, %v556
    %v711 = vpack.c.b16 %v559, %v557
    %v712 = vpack.c.b16 %v562, %v560
    %v713 = vpack.c.b16 %v563, %v561
    %v714 = vpack.c.b16 %v566, %v564
    %v715 = vpack.c.b16 %v567, %v565
    %v716 = vpack.c.b16 %v570, %v568
    %v717 = vpack.c.b16 %v571, %v569
    %v718 = vpack.c.b16 %v574, %v572
    %v719 = vpack.c.b16 %v575, %v573
    %v720 = vpack.c.b16 %v578, %v576
    %v721 = vpack.c.b16 %v579, %v577
    %v722 = vpack.c.b16 %v582, %v580
    %v723 = vpack.c.b16 %v583, %v581
    %v724 = vpack.c.b16 %v586, %v584
    %v725 = vpack.c.b16 %v587, %v585
    %v726 = vpack.c.b16 %v590, %v588
    %v727 = vpack.c.b16 %v591, %v589
    %v728 = vpack.c.b16 %v594, %v592
    %v729 = vpack.c.b16 %v595, %v593
    %v730 = vpack.c.b16 %v598, %v596
    %v731 = vpack.c.b16 %v599, %v597
    %v732 = vpack.c.b16 %v602, %v600
    %v733 = vpack.c.b16 %v603, %v601
    %v734 = vpack.c.b16 %v606, %v604
    %v735 = vpack.c.b16 %v607, %v605
    %v736 = vpack.c.b16 %v610, %v608
    %v737 = vpack.c.b16 %v611, %v609
    %v738 = vpack.c.b16 %v614, %v612
    %v739 = vpack.c.b16 %v615, %v613
    %v740 = vpack.c.b16 %v618, %v616
    %v741 = vpack.c.b16 %v619, %v617
    %v742 = vpack.c.b16 %v622, %v620
    %v743 = vpack.c.b16 %v623, %v621
    %v744 = vpack.c.b16 %v626, %v624
    %v745 = vpack.c.b16 %v627, %v625
    %v746 = vpack.c.b16 %v630, %v628
    %v747 = vpack.c.b16 %v631, %v629
    %v748 = vpack.c.b16 %v634, %v632
    %v749 = vpack.c.b16 %v635, %v633
    %v750 = vpack.c.b16 %v638, %v636
    %v751 = vpack.c.b16 %v639, %v637
    %864 = vmatpush.bf16.msra.mxu0 %v654
    %865 = vmatpush.bf16.msra.mxu0 %v652
    %866 = vmatpush.bf16.msra.mxu0 %v650
    %867 = vmatpush.bf16.msra.mxu0 %v648
    %868 = vmatpush.bf16.msra.mxu0 %v646
    %869 = vmatpush.bf16.msra.mxu0 %v644
    %870 = vmatpush.bf16.msra.mxu0 %v642
    %871 = vmatpush.bf16.msra.mxu0 %v640
    %872 = vmatmul.bf16.gmra.mxu0 %v290
    %v873 = vpop.f32.mrf.mxu0
    %v874 = vadd.f32 %v275, %v873
    %v875 = vpop.f32.mrf.mxu0
    %876 = vdwg.mxu0
    %877 = vmatpush.bf16.msra.mxu0 %v670
    %878 = vmatpush.bf16.msra.mxu0 %v668
    %879 = vmatpush.bf16.msra.mxu0 %v666
    %880 = vmatpush.bf16.msra.mxu0 %v664
    %881 = vmatpush.bf16.msra.mxu0 %v662
    %882 = vmatpush.bf16.msra.mxu0 %v660
    %883 = vmatpush.bf16.msra.mxu0 %v658
    %884 = vmatpush.bf16.msra.mxu0 %v656
    %885 = vmatmul.bf16.gmra.mxu0 %v291
    %v886 = vpop.f32.mrf.mxu0
    %v887 = vadd.f32 %v874, %v886
    %v888 = vpop.f32.mrf.mxu0
    %889 = vdwg.mxu0
    %890 = vmatpush.bf16.msra.mxu0 %v686
    %891 = vmatpush.bf16.msra.mxu0 %v684
    %892 = vmatpush.bf16.msra.mxu0 %v682
    %893 = vmatpush.bf16.msra.mxu0 %v680
    %894 = vmatpush.bf16.msra.mxu0 %v678
    %895 = vmatpush.bf16.msra.mxu0 %v676
    %896 = vmatpush.bf16.msra.mxu0 %v674
    %897 = vmatpush.bf16.msra.mxu0 %v672
    %898 = vmatmul.bf16.gmra.mxu0 %v292
    %v899 = vpop.f32.mrf.mxu0
    %v900 = vadd.f32 %v887, %v899
    %v901 = vpop.f32.mrf.mxu0
    %902 = vdwg.mxu0
    %903 = vmatpush.bf16.msra.mxu0 %v702
    %904 = vmatpush.bf16.msra.mxu0 %v700
    %905 = vmatpush.bf16.msra.mxu0 %v698
    %906 = vmatpush.bf16.msra.mxu0 %v696
    %907 = vmatpush.bf16.msra.mxu0 %v694
    %908 = vmatpush.bf16.msra.mxu0 %v692
    %909 = vmatpush.bf16.msra.mxu0 %v690
    %910 = vmatpush.bf16.msra.mxu0 %v688
    %911 = vmatmul.bf16.gmra.mxu0 %v293
    %v912 = vpop.f32.mrf.mxu0
    %v913 = vadd.f32 %v900, %v912
    %v914 = vpop.f32.mrf.mxu0
    %915 = vdwg.mxu0
    %916 = vmatpush.bf16.msra.mxu0 %v718
    %917 = vmatpush.bf16.msra.mxu0 %v716
    %918 = vmatpush.bf16.msra.mxu0 %v714
    %919 = vmatpush.bf16.msra.mxu0 %v712
    %920 = vmatpush.bf16.msra.mxu0 %v710
    %921 = vmatpush.bf16.msra.mxu0 %v708
    %922 = vmatpush.bf16.msra.mxu0 %v706
    %923 = vmatpush.bf16.msra.mxu0 %v704
    %924 = vmatmul.bf16.gmra.mxu0 %v294
    %v925 = vpop.f32.mrf.mxu0
    %v926 = vadd.f32 %v913, %v925
    %v927 = vpop.f32.mrf.mxu0
    %928 = vdwg.mxu0
    %929 = vmatpush.bf16.msra.mxu0 %v734
    %930 = vmatpush.bf16.msra.mxu0 %v732
    %931 = vmatpush.bf16.msra.mxu0 %v730
    %932 = vmatpush.bf16.msra.mxu0 %v728
    %933 = vmatpush.bf16.msra.mxu0 %v726
    %934 = vmatpush.bf16.msra.mxu0 %v724
    %935 = vmatpush.bf16.msra.mxu0 %v722
    %936 = vmatpush.bf16.msra.mxu0 %v720
    %937 = vmatmul.bf16.gmra.mxu0 %v295
    %v938 = vpop.f32.mrf.mxu0
    %v939 = vadd.f32 %v926, %v938
    %v940 = vpop.f32.mrf.mxu0
    %941 = vdwg.mxu0
    %942 = vmatpush.bf16.msra.mxu0 %v750
    %943 = vmatpush.bf16.msra.mxu0 %v748
    %944 = vmatpush.bf16.msra.mxu0 %v746
    %945 = vmatpush.bf16.msra.mxu0 %v744
    %946 = vmatpush.bf16.msra.mxu0 %v742
    %947 = vmatpush.bf16.msra.mxu0 %v740
    %948 = vmatpush.bf16.msra.mxu0 %v738
    %949 = vmatpush.bf16.msra.mxu0 %v736
    %950 = vmatmul.bf16.gmra.mxu0 %v296
    %v951 = vpop.f32.mrf.mxu0
    %v952 = vadd.f32 %v939, %v951
    %v953 = vpop.f32.mrf.mxu0
    %954 = vdwg.mxu0
    %955 = vmatpush.bf16.msra.mxu0 %v655
    %956 = vmatpush.bf16.msra.mxu0 %v653
    %957 = vmatpush.bf16.msra.mxu0 %v651
    %958 = vmatpush.bf16.msra.mxu0 %v649
    %959 = vmatpush.bf16.msra.mxu0 %v647
    %960 = vmatpush.bf16.msra.mxu0 %v645
    %961 = vmatpush.bf16.msra.mxu0 %v643
    %962 = vmatpush.bf16.msra.mxu0 %v641
    %963 = vmatmul.bf16.gmra.mxu0 %v290
    %v964 = vpop.f32.mrf.mxu0
    %v965 = vadd.f32 %v276, %v964
    %v966 = vpop.f32.mrf.mxu0
    %967 = vdwg.mxu0
    %968 = vmatpush.bf16.msra.mxu0 %v671
    %969 = vmatpush.bf16.msra.mxu0 %v669
    %970 = vmatpush.bf16.msra.mxu0 %v667
    %971 = vmatpush.bf16.msra.mxu0 %v665
    %972 = vmatpush.bf16.msra.mxu0 %v663
    %973 = vmatpush.bf16.msra.mxu0 %v661
    %974 = vmatpush.bf16.msra.mxu0 %v659
    %975 = vmatpush.bf16.msra.mxu0 %v657
    %976 = vmatmul.bf16.gmra.mxu0 %v291
    %v977 = vpop.f32.mrf.mxu0
    %v978 = vadd.f32 %v965, %v977
    %v979 = vpop.f32.mrf.mxu0
    %980 = vdwg.mxu0
    %981 = vmatpush.bf16.msra.mxu0 %v687
    %982 = vmatpush.bf16.msra.mxu0 %v685
    %983 = vmatpush.bf16.msra.mxu0 %v683
    %984 = vmatpush.bf16.msra.mxu0 %v681
    %985 = vmatpush.bf16.msra.mxu0 %v679
    %986 = vmatpush.bf16.msra.mxu0 %v677
    %987 = vmatpush.bf16.msra.mxu0 %v675
    %988 = vmatpush.bf16.msra.mxu0 %v673
    %989 = vmatmul.bf16.gmra.mxu0 %v292
    %v990 = vpop.f32.mrf.mxu0
    %v991 = vadd.f32 %v978, %v990
    %v992 = vpop.f32.mrf.mxu0
    %993 = vdwg.mxu0
    %994 = vmatpush.bf16.msra.mxu0 %v703
    %995 = vmatpush.bf16.msra.mxu0 %v701
    %996 = vmatpush.bf16.msra.mxu0 %v699
    %997 = vmatpush.bf16.msra.mxu0 %v697
    %998 = vmatpush.bf16.msra.mxu0 %v695
    %999 = vmatpush.bf16.msra.mxu0 %v693
    %1000 = vmatpush.bf16.msra.mxu0 %v691
    %1001 = vmatpush.bf16.msra.mxu0 %v689
    %1002 = vmatmul.bf16.gmra.mxu0 %v293
    %v1003 = vpop.f32.mrf.mxu0
    %v1004 = vadd.f32 %v991, %v1003
    %v1005 = vpop.f32.mrf.mxu0
    %1006 = vdwg.mxu0
    %1007 = vmatpush.bf16.msra.mxu0 %v719
    %1008 = vmatpush.bf16.msra.mxu0 %v717
    %1009 = vmatpush.bf16.msra.mxu0 %v715
    %1010 = vmatpush.bf16.msra.mxu0 %v713
    %1011 = vmatpush.bf16.msra.mxu0 %v711
    %1012 = vmatpush.bf16.msra.mxu0 %v709
    %1013 = vmatpush.bf16.msra.mxu0 %v707
    %1014 = vmatpush.bf16.msra.mxu0 %v705
    %1015 = vmatmul.bf16.gmra.mxu0 %v294
    %v1016 = vpop.f32.mrf.mxu0
    %v1017 = vadd.f32 %v1004, %v1016
    %v1018 = vpop.f32.mrf.mxu0
    %1019 = vdwg.mxu0
    %1020 = vmatpush.bf16.msra.mxu0 %v735
    %1021 = vmatpush.bf16.msra.mxu0 %v733
    %1022 = vmatpush.bf16.msra.mxu0 %v731
    %1023 = vmatpush.bf16.msra.mxu0 %v729
    %1024 = vmatpush.bf16.msra.mxu0 %v727
    %1025 = vmatpush.bf16.msra.mxu0 %v725
    %1026 = vmatpush.bf16.msra.mxu0 %v723
    %1027 = vmatpush.bf16.msra.mxu0 %v721
    %1028 = vmatmul.bf16.gmra.mxu0 %v295
    %v1029 = vpop.f32.mrf.mxu0
    %v1030 = vadd.f32 %v1017, %v1029
    %v1031 = vpop.f32.mrf.mxu0
    %1032 = vdwg.mxu0
    %1033 = vmatpush.bf16.msra.mxu0 %v751
    %1034 = vmatpush.bf16.msra.mxu0 %v749
    %1035 = vmatpush.bf16.msra.mxu0 %v747
    %1036 = vmatpush.bf16.msra.mxu0 %v745
    %1037 = vmatpush.bf16.msra.mxu0 %v743
    %1038 = vmatpush.bf16.msra.mxu0 %v741
    %1039 = vmatpush.bf16.msra.mxu0 %v739
    %1040 = vmatpush.bf16.msra.mxu0 %v737
    %1041 = vmatmul.bf16.gmra.mxu0 %v296
    %v1042 = vpop.f32.mrf.mxu0
    %v1043 = vadd.f32 %v1030, %v1042
    %v1044 = vpop.f32.mrf.mxu0
    %1045 = vdwg.mxu0
    %v1046 = vmax.f32 %v952, 0.0
    %v1047 = vmax.f32 %v1043, 0.0
    %v1048 = vpack.c.bf16 %v1046, %v1046
    %v1049 = vpack.c.bf16 %v1047, %v1047
    %v1050 = vld [vmem:[#allocation8] sm:$0xf]
    %v1051 = vld [vmem:[#allocation8 + $0x4] sm:$0xf]
    %v1052 = vld [vmem:[#allocation8 + $0x8] sm:$0xf]
    %v1053 = vld [vmem:[#allocation8 + $0xc] sm:$0xf]
    %v1054 = vld [vmem:[#allocation8 + $0x10] sm:$0xf]
    %v1055 = vld [vmem:[#allocation8 + $0x14] sm:$0xf]
    %v1056 = vld [vmem:[#allocation8 + $0x18] sm:$0xf]
    %v1057 = vld [vmem:[#allocation8 + $0x1c] sm:$0xf]
    %v1058 = vld [vmem:[#allocation8 + $0x20] sm:$0xf]
    %v1059 = vld [vmem:[#allocation8 + $0x24] sm:$0xf]
    %v1060 = vld [vmem:[#allocation8 + $0x28] sm:$0xf]
    %v1061 = vld [vmem:[#allocation8 + $0x2c] sm:$0xf]
    %v1062 = vld [vmem:[#allocation8 + $0x30] sm:$0xf]
    %v1063 = vld [vmem:[#allocation8 + $0x34] sm:$0xf]
    %v1064 = vld [vmem:[#allocation8 + $0x38] sm:$0xf]
    %v1065 = vld [vmem:[#allocation8 + $0x3c] sm:$0xf]
    %v1066 = vld [vmem:[#allocation8 + $0x40] sm:$0xf]
    %v1067 = vld [vmem:[#allocation8 + $0x44] sm:$0xf]
    %v1068 = vld [vmem:[#allocation8 + $0x48] sm:$0xf]
    %v1069 = vld [vmem:[#allocation8 + $0x4c] sm:$0xf]
    %v1070 = vld [vmem:[#allocation8 + $0x50] sm:$0xf]
    %v1071 = vld [vmem:[#allocation8 + $0x54] sm:$0xf]
    %v1072 = vld [vmem:[#allocation8 + $0x58] sm:$0xf]
    %v1073 = vld [vmem:[#allocation8 + $0x5c] sm:$0xf]
    %v1074 = vld [vmem:[#allocation8 + $0x60] sm:$0xf]
    %v1075 = vld [vmem:[#allocation8 + $0x64] sm:$0xf]
    %v1076 = vld [vmem:[#allocation8 + $0x68] sm:$0xf]
    %v1077 = vld [vmem:[#allocation8 + $0x6c] sm:$0xf]
    %v1078 = vld [vmem:[#allocation8 + $0x70] sm:$0xf]
    %v1079 = vld [vmem:[#allocation8 + $0x74] sm:$0xf]
    %v1080 = vld [vmem:[#allocation8 + $0x78] sm:$0xf]
    %v1081 = vld [vmem:[#allocation8 + $0x7c] sm:$0xf]
    %v1082 = vld [vmem:[%s4] sm:$0x1]
    %v1084 = vperm.slane %v1082, 0
    %v1118 = vunpack.c.l.b16 %v1050
    %v1119 = vunpack.c.l.b16 %v1051
    %v1120 = vunpack.c.l.b16 %v1052
    %v1121 = vunpack.c.l.b16 %v1053
    %v1122 = vunpack.c.l.b16 %v1054
    %v1123 = vunpack.c.l.b16 %v1055
    %v1124 = vunpack.c.l.b16 %v1056
    %v1125 = vunpack.c.l.b16 %v1057
    %v1126 = vunpack.c.l.b16 %v1058
    %v1127 = vunpack.c.l.b16 %v1059
    %v1128 = vunpack.c.l.b16 %v1060
    %v1129 = vunpack.c.l.b16 %v1061
    %v1130 = vunpack.c.l.b16 %v1062
    %v1131 = vunpack.c.l.b16 %v1063
    %v1132 = vunpack.c.l.b16 %v1064
    %v1133 = vunpack.c.l.b16 %v1065
    %v1134 = vunpack.c.l.b16 %v1066
    %v1135 = vunpack.c.l.b16 %v1067
    %v1136 = vunpack.c.l.b16 %v1068
    %v1137 = vunpack.c.l.b16 %v1069
    %v1138 = vunpack.c.l.b16 %v1070
    %v1139 = vunpack.c.l.b16 %v1071
    %v1140 = vunpack.c.l.b16 %v1072
    %v1141 = vunpack.c.l.b16 %v1073
    %v1142 = vunpack.c.l.b16 %v1074
    %v1143 = vunpack.c.l.b16 %v1075
    %v1144 = vunpack.c.l.b16 %v1076
    %v1145 = vunpack.c.l.b16 %v1077
    %v1146 = vunpack.c.l.b16 %v1078
    %v1147 = vunpack.c.l.b16 %v1079
    %v1148 = vunpack.c.l.b16 %v1080
    %v1149 = vunpack.c.l.b16 %v1081
    %v1150 = vpack.c.b16 %v1119, %v1118
    %v1151 = vpack.c.b16 %v1121, %v1120
    %v1152 = vpack.c.b16 %v1123, %v1122
    %v1153 = vpack.c.b16 %v1125, %v1124
    %v1154 = vpack.c.b16 %v1127, %v1126
    %v1155 = vpack.c.b16 %v1129, %v1128
    %v1156 = vpack.c.b16 %v1131, %v1130
    %v1157 = vpack.c.b16 %v1133, %v1132
    %v1158 = vpack.c.b16 %v1135, %v1134
    %v1159 = vpack.c.b16 %v1137, %v1136
    %v1160 = vpack.c.b16 %v1139, %v1138
    %v1161 = vpack.c.b16 %v1141, %v1140
    %v1162 = vpack.c.b16 %v1143, %v1142
    %v1163 = vpack.c.b16 %v1145, %v1144
    %v1164 = vpack.c.b16 %v1147, %v1146
    %v1165 = vpack.c.b16 %v1149, %v1148
    %1182 = vmatpush.bf16.msra.mxu0 %v1157
    %1183 = vmatpush.bf16.msra.mxu0 %v1156
    %1184 = vmatpush.bf16.msra.mxu0 %v1155
    %1185 = vmatpush.bf16.msra.mxu0 %v1154
    %1186 = vmatpush.bf16.msra.mxu0 %v1153
    %1187 = vmatpush.bf16.msra.mxu0 %v1152
    %1188 = vmatpush.bf16.msra.mxu0 %v1151
    %1189 = vmatpush.bf16.msra.mxu0 %v1150
    %1190 = vmatmul.bf16.gmra.mxu0 %v1048
    %v1191 = vpop.f32.mrf.mxu0
    %v1192 = vadd.f32 %v1084, %v1191
    %v1193 = vpop.f32.mrf.mxu0
    %1194 = vdwg.mxu0
    %1195 = vmatpush.bf16.msra.mxu0 %v1165
    %1196 = vmatpush.bf16.msra.mxu0 %v1164
    %1197 = vmatpush.bf16.msra.mxu0 %v1163
    %1198 = vmatpush.bf16.msra.mxu0 %v1162
    %1199 = vmatpush.bf16.msra.mxu0 %v1161
    %1200 = vmatpush.bf16.msra.mxu0 %v1160
    %1201 = vmatpush.bf16.msra.mxu0 %v1159
    %1202 = vmatpush.bf16.msra.mxu0 %v1158
    %1203 = vmatmul.bf16.gmra.mxu0 %v1049
    %v1204 = vpop.f32.mrf.mxu0
    %v1205 = vadd.f32 %v1192, %v1204
    %v1206 = vpop.f32.mrf.mxu0
    %1207 = vdwg.mxu0
    %v1208 = vmul.f32 %v1205, 0.5
    %v1209 = vmul.f32 %v1208, 1.442695
    %v1210 = vpow.pop %v1209
    %v1211 = vld [vmem:[#allocation10] sm:$0xff]
    %1213 = vrot.lane.b32.xlu0 %v1210, 112
    %v1214 = vpop.permute.xlu0 %1213
    %v1216 = vmul.f32 %v1211, %v1214
    %v1217 = vadd.f32 %v1216, %v1205
    %v1218 = vpack.c.bf16 %v1217, %v1217
    %v1219 = vld [vmem:[#allocation11] sm:$0xff]
    %v1220 = vld [vmem:[#allocation11 + $0x8] sm:$0xff]
    %v1221 = vld [vmem:[#allocation13] sm:$0x3]
    %v1223 = vperm.slane %v1221, 0
    %v1224 = vperm.slane %v1221, 1
    %v1229 = vunpack.c.l.b16 %v1219
    %v1230 = vunpack.c.h.b16 %v1219
    %v1231 = vunpack.c.l.b16 %v1220
    %v1232 = vunpack.c.h.b16 %v1220
    %v1233 = vpack.c.b16 %v1231, %v1229
    %v1234 = vpack.c.b16 %v1232, %v1230
    %vm1237 = vcmask 130048
    %v1239 = vsel %vm1237, %v1218, 0
    %1241 = vmatpush.bf16.msra.mxu0 0
    %1242 = vmatpush.bf16.msra.mxu0 0
    %1243 = vmatpush.bf16.msra.mxu0 0
    %1244 = vmatpush.bf16.msra.mxu0 0
    %1245 = vmatpush.bf16.msra.mxu0 0
    %1246 = vmatpush.bf16.msra.mxu0 0
    %1247 = vmatpush.bf16.msra.mxu0 0
    %1248 = vmatpush.bf16.msra.mxu0 %v1233
    %1249 = vmatmul.bf16.gmra.mxu0 %v1239
    %v1250 = vpop.f32.mrf.mxu0
    %v1251 = vadd.f32 %v1223, %v1250
    %v1252 = vpop.f32.mrf.mxu0
    %1253 = vdwg.mxu0
    %1254 = vmatpush.bf16.msra.mxu0 0
    %1255 = vmatpush.bf16.msra.mxu0 0
    %1256 = vmatpush.bf16.msra.mxu0 0
    %1257 = vmatpush.bf16.msra.mxu0 0
    %1258 = vmatpush.bf16.msra.mxu0 0
    %1259 = vmatpush.bf16.msra.mxu0 0
    %1260 = vmatpush.bf16.msra.mxu0 0
    %1261 = vmatpush.bf16.msra.mxu0 %v1234
    %1262 = vmatmul.bf16.gmra.mxu0 %v1239
    %v1263 = vpop.f32.mrf.mxu0
    %v1264 = vadd.f32 %v1224, %v1263
    %v1265 = vpop.f32.mrf.mxu0
    %1266 = vdwg.mxu0
    %v1267 = vmax.f32 %v1251, 0.0
    %v1268 = vmax.f32 %v1264, 0.0
    %v1269 = vpack.c.bf16 %v1267, %v1267
    %v1270 = vpack.c.bf16 %v1268, %v1268
    %v1271 = vld [vmem:[#allocation14] sm:$0xff]
    %v1272 = vld [vmem:[#allocation14 + $0x8] sm:$0xff]
    %v1273 = vld [vmem:[#allocation14 + $0x10] sm:$0xff]
    %v1274 = vld [vmem:[#allocation14 + $0x18] sm:$0xf]
    %v1275 = vld [vmem:[#allocation14 + $0x1c] sm:$0xff]
    %v1276 = vld [vmem:[#allocation14 + $0x24] sm:$0xff]
    %v1277 = vld [vmem:[#allocation14 + $0x2c] sm:$0xff]
    %v1278 = vld [vmem:[#allocation14 + $0x34] sm:$0xf]
    %v1279 = vld [vmem:[#allocation14 + $0x38] sm:$0xff]
    %v1280 = vld [vmem:[#allocation14 + $0x40] sm:$0xff]
    %v1281 = vld [vmem:[#allocation14 + $0x48] sm:$0xff]
    %v1282 = vld [vmem:[#allocation14 + $0x50] sm:$0xf]
    %v1283 = vld [vmem:[#allocation14 + $0x54] sm:$0xff]
    %v1284 = vld [vmem:[#allocation14 + $0x5c] sm:$0xff]
    %v1285 = vld [vmem:[#allocation14 + $0x64] sm:$0xff]
    %v1286 = vld [vmem:[#allocation14 + $0x6c] sm:$0xf]
    %v1287 = vld [vmem:[#allocation14 + $0x70] sm:$0xff]
    %v1288 = vld [vmem:[#allocation14 + $0x78] sm:$0xff]
    %v1289 = vld [vmem:[#allocation14 + $0x80] sm:$0xff]
    %v1290 = vld [vmem:[#allocation14 + $0x88] sm:$0xf]
    %v1291 = vld [vmem:[#allocation14 + $0x8c] sm:$0xff]
    %v1292 = vld [vmem:[#allocation14 + $0x94] sm:$0xff]
    %v1293 = vld [vmem:[#allocation14 + $0x9c] sm:$0xff]
    %v1294 = vld [vmem:[#allocation14 + $0xa4] sm:$0xf]
    %v1295 = vld [vmem:[#allocation14 + $0xa8] sm:$0xff]
    %v1296 = vld [vmem:[#allocation14 + $0xb0] sm:$0xff]
    %v1297 = vld [vmem:[#allocation14 + $0xb8] sm:$0xff]
    %v1298 = vld [vmem:[#allocation14 + $0xc0] sm:$0xf]
    %v1299 = vld [vmem:[#allocation14 + $0xc4] sm:$0xff]
    %v1300 = vld [vmem:[#allocation14 + $0xcc] sm:$0xff]
    %v1301 = vld [vmem:[#allocation14 + $0xd4] sm:$0xff]
    %v1302 = vld [vmem:[#allocation14 + $0xdc] sm:$0xf]
    %v1303 = vld [vmem:[#allocation14 + $0xe0] sm:$0xff]
    %v1304 = vld [vmem:[#allocation14 + $0xe8] sm:$0xff]
    %v1305 = vld [vmem:[#allocation14 + $0xf0] sm:$0xff]
    %v1306 = vld [vmem:[#allocation14 + $0xf8] sm:$0xf]
    %v1307 = vld [vmem:[#allocation14 + $0xfc] sm:$0xff]
    %v1308 = vld [vmem:[#allocation14 + $0x104] sm:$0xff]
    %v1309 = vld [vmem:[#allocation14 + $0x10c] sm:$0xff]
    %v1310 = vld [vmem:[#allocation14 + $0x114] sm:$0xf]
    %v1311 = vld [vmem:[#allocation14 + $0x118] sm:$0xff]
    %v1312 = vld [vmem:[#allocation14 + $0x120] sm:$0xff]
    %v1313 = vld [vmem:[#allocation14 + $0x128] sm:$0xff]
    %v1314 = vld [vmem:[#allocation14 + $0x130] sm:$0xf]
    %v1315 = vld [vmem:[#allocation14 + $0x134] sm:$0xff]
    %v1316 = vld [vmem:[#allocation14 + $0x13c] sm:$0xff]
    %v1317 = vld [vmem:[#allocation14 + $0x144] sm:$0xff]
    %v1318 = vld [vmem:[#allocation14 + $0x14c] sm:$0xf]
    %v1319 = vld [vmem:[#allocation14 + $0x150] sm:$0xff]
    %v1320 = vld [vmem:[#allocation14 + $0x158] sm:$0xff]
    %v1321 = vld [vmem:[#allocation14 + $0x160] sm:$0xff]
    %v1322 = vld [vmem:[#allocation14 + $0x168] sm:$0xf]
    %v1323 = vld [vmem:[#allocation14 + $0x16c] sm:$0xff]
    %v1324 = vld [vmem:[#allocation14 + $0x174] sm:$0xff]
    %v1325 = vld [vmem:[#allocation14 + $0x17c] sm:$0xff]
    %v1326 = vld [vmem:[#allocation14 + $0x184] sm:$0xf]
    %v1327 = vld [vmem:[#allocation14 + $0x188] sm:$0xff]
    %v1328 = vld [vmem:[#allocation14 + $0x190] sm:$0xff]
    %v1329 = vld [vmem:[#allocation14 + $0x198] sm:$0xff]
    %v1330 = vld [vmem:[#allocation14 + $0x1a0] sm:$0xf]
    %v1331 = vld [vmem:[#allocation14 + $0x1a4] sm:$0xff]
    %v1332 = vld [vmem:[#allocation14 + $0x1ac] sm:$0xff]
    %v1333 = vld [vmem:[#allocation14 + $0x1b4] sm:$0xff]
    %v1334 = vld [vmem:[#allocation14 + $0x1bc] sm:$0xf]
    %v1335 = vld [vmem:[#allocation14 + $0x1c0] sm:$0xff]
    %v1336 = vld [vmem:[#allocation14 + $0x1c8] sm:$0xff]
    %v1337 = vld [vmem:[#allocation14 + $0x1d0] sm:$0xff]
    %v1338 = vld [vmem:[#allocation14 + $0x1d8] sm:$0xf]
    %v1339 = vld [vmem:[#allocation14 + $0x1dc] sm:$0xff]
    %v1340 = vld [vmem:[#allocation14 + $0x1e4] sm:$0xff]
    %v1341 = vld [vmem:[#allocation14 + $0x1ec] sm:$0xff]
    %v1342 = vld [vmem:[#allocation14 + $0x1f4] sm:$0xf]
    %v1343 = vld [vmem:[#allocation14 + $0x1f8] sm:$0xff]
    %v1344 = vld [vmem:[#allocation14 + $0x200] sm:$0xff]
    %v1345 = vld [vmem:[#allocation14 + $0x208] sm:$0xff]
    %v1346 = vld [vmem:[#allocation14 + $0x210] sm:$0xf]
    %v1347 = vld [vmem:[#allocation14 + $0x214] sm:$0xff]
    %v1348 = vld [vmem:[#allocation14 + $0x21c] sm:$0xff]
    %v1349 = vld [vmem:[#allocation14 + $0x224] sm:$0xff]
    %v1350 = vld [vmem:[#allocation14 + $0x22c] sm:$0xf]
    %v1351 = vld [vmem:[#allocation14 + $0x230] sm:$0xff]
    %v1352 = vld [vmem:[#allocation14 + $0x238] sm:$0xff]
    %v1353 = vld [vmem:[#allocation14 + $0x240] sm:$0xff]
    %v1354 = vld [vmem:[#allocation14 + $0x248] sm:$0xf]
    %v1355 = vld [vmem:[#allocation14 + $0x24c] sm:$0xff]
    %v1356 = vld [vmem:[#allocation14 + $0x254] sm:$0xff]
    %v1357 = vld [vmem:[#allocation14 + $0x25c] sm:$0xff]
    %v1358 = vld [vmem:[#allocation14 + $0x264] sm:$0xf]
    %v1359 = vld [vmem:[#allocation14 + $0x268] sm:$0xff]
    %v1360 = vld [vmem:[#allocation14 + $0x270] sm:$0xff]
    %v1361 = vld [vmem:[#allocation14 + $0x278] sm:$0xff]
    %v1362 = vld [vmem:[#allocation14 + $0x280] sm:$0xf]
    %v1363 = vld [vmem:[#allocation14 + $0x284] sm:$0xff]
    %v1364 = vld [vmem:[#allocation14 + $0x28c] sm:$0xff]
    %v1365 = vld [vmem:[#allocation14 + $0x294] sm:$0xff]
    %v1366 = vld [vmem:[#allocation14 + $0x29c] sm:$0xf]
    %v1367 = vld [vmem:[#allocation14 + $0x2a0] sm:$0xff]
    %v1368 = vld [vmem:[#allocation14 + $0x2a8] sm:$0xff]
    %v1369 = vld [vmem:[#allocation14 + $0x2b0] sm:$0xff]
    %v1370 = vld [vmem:[#allocation14 + $0x2b8] sm:$0xf]
    %v1371 = vld [vmem:[#allocation14 + $0x2bc] sm:$0xff]
    %v1372 = vld [vmem:[#allocation14 + $0x2c4] sm:$0xff]
    %v1373 = vld [vmem:[#allocation14 + $0x2cc] sm:$0xff]
    %v1374 = vld [vmem:[#allocation14 + $0x2d4] sm:$0xf]
    %v1375 = vld [vmem:[#allocation14 + $0x2d8] sm:$0xff]
    %v1376 = vld [vmem:[#allocation14 + $0x2e0] sm:$0xff]
    %v1377 = vld [vmem:[#allocation14 + $0x2e8] sm:$0xff]
    %v1378 = vld [vmem:[#allocation14 + $0x2f0] sm:$0xf]
    %v1379 = vld [vmem:[#allocation14 + $0x2f4] sm:$0xff]
    %v1380 = vld [vmem:[#allocation14 + $0x2fc] sm:$0xff]
    %v1381 = vld [vmem:[#allocation14 + $0x304] sm:$0xff]
    %v1382 = vld [vmem:[#allocation14 + $0x30c] sm:$0xf]
    %v1383 = vld [vmem:[#allocation14 + $0x310] sm:$0xff]
    %v1384 = vld [vmem:[#allocation14 + $0x318] sm:$0xff]
    %v1385 = vld [vmem:[#allocation14 + $0x320] sm:$0xff]
    %v1386 = vld [vmem:[#allocation14 + $0x328] sm:$0xf]
    %v1387 = vld [vmem:[#allocation14 + $0x32c] sm:$0xff]
    %v1388 = vld [vmem:[#allocation14 + $0x334] sm:$0xff]
    %v1389 = vld [vmem:[#allocation14 + $0x33c] sm:$0xff]
    %v1390 = vld [vmem:[#allocation14 + $0x344] sm:$0xf]
    %v1391 = vld [vmem:[#allocation14 + $0x348] sm:$0xff]
    %v1392 = vld [vmem:[#allocation14 + $0x350] sm:$0xff]
    %v1393 = vld [vmem:[#allocation14 + $0x358] sm:$0xff]
    %v1394 = vld [vmem:[#allocation14 + $0x360] sm:$0xf]
    %v1395 = vld [vmem:[#allocation14 + $0x364] sm:$0xff]
    %v1396 = vld [vmem:[#allocation14 + $0x36c] sm:$0xff]
    %v1397 = vld [vmem:[#allocation14 + $0x374] sm:$0xff]
    %v1398 = vld [vmem:[#allocation14 + $0x37c] sm:$0xf]
    %v1399 = vld [vmem:[%s9] sm:$0xff]
    %v1401 = vperm.slane %v1399, 0
    %v1402 = vperm.slane %v1399, 1
    %v1403 = vperm.slane %v1399, 2
    %v1404 = vperm.slane %v1399, 3
    %v1405 = vperm.slane %v1399, 4
    %v1406 = vperm.slane %v1399, 5
    %v1407 = vperm.slane %v1399, 6
    %v1543 = vunpack.c.l.b16 %v1271
    %v1544 = vunpack.c.h.b16 %v1271
    %v1545 = vunpack.c.l.b16 %v1272
    %v1546 = vunpack.c.h.b16 %v1272
    %v1547 = vunpack.c.l.b16 %v1273
    %v1548 = vunpack.c.h.b16 %v1273
    %v1549 = vunpack.c.l.b16 %v1274
    %v1550 = vunpack.c.l.b16 %v1275
    %v1551 = vunpack.c.h.b16 %v1275
    %v1552 = vunpack.c.l.b16 %v1276
    %v1553 = vunpack.c.h.b16 %v1276
    %v1554 = vunpack.c.l.b16 %v1277
    %v1555 = vunpack.c.h.b16 %v1277
    %v1556 = vunpack.c.l.b16 %v1278
    %v1557 = vunpack.c.l.b16 %v1279
    %v1558 = vunpack.c.h.b16 %v1279
    %v1559 = vunpack.c.l.b16 %v1280
    %v1560 = vunpack.c.h.b16 %v1280
    %v1561 = vunpack.c.l.b16 %v1281
    %v1562 = vunpack.c.h.b16 %v1281
    %v1563 = vunpack.c.l.b16 %v1282
    %v1564 = vunpack.c.l.b16 %v1283
    %v1565 = vunpack.c.h.b16 %v1283
    %v1566 = vunpack.c.l.b16 %v1284
    %v1567 = vunpack.c.h.b16 %v1284
    %v1568 = vunpack.c.l.b16 %v1285
    %v1569 = vunpack.c.h.b16 %v1285
    %v1570 = vunpack.c.l.b16 %v1286
    %v1571 = vunpack.c.l.b16 %v1287
    %v1572 = vunpack.c.h.b16 %v1287
    %v1573 = vunpack.c.l.b16 %v1288
    %v1574 = vunpack.c.h.b16 %v1288
    %v1575 = vunpack.c.l.b16 %v1289
    %v1576 = vunpack.c.h.b16 %v1289
    %v1577 = vunpack.c.l.b16 %v1290
    %v1578 = vunpack.c.l.b16 %v1291
    %v1579 = vunpack.c.h.b16 %v1291
    %v1580 = vunpack.c.l.b16 %v1292
    %v1581 = vunpack.c.h.b16 %v1292
    %v1582 = vunpack.c.l.b16 %v1293
    %v1583 = vunpack.c.h.b16 %v1293
    %v1584 = vunpack.c.l.b16 %v1294
    %v1585 = vunpack.c.l.b16 %v1295
    %v1586 = vunpack.c.h.b16 %v1295
    %v1587 = vunpack.c.l.b16 %v1296
    %v1588 = vunpack.c.h.b16 %v1296
    %v1589 = vunpack.c.l.b16 %v1297
    %v1590 = vunpack.c.h.b16 %v1297
    %v1591 = vunpack.c.l.b16 %v1298
    %v1592 = vunpack.c.l.b16 %v1299
    %v1593 = vunpack.c.h.b16 %v1299
    %v1594 = vunpack.c.l.b16 %v1300
    %v1595 = vunpack.c.h.b16 %v1300
    %v1596 = vunpack.c.l.b16 %v1301
    %v1597 = vunpack.c.h.b16 %v1301
    %v1598 = vunpack.c.l.b16 %v1302
    %v1599 = vunpack.c.l.b16 %v1303
    %v1600 = vunpack.c.h.b16 %v1303
    %v1601 = vunpack.c.l.b16 %v1304
    %v1602 = vunpack.c.h.b16 %v1304
    %v1603 = vunpack.c.l.b16 %v1305
    %v1604 = vunpack.c.h.b16 %v1305
    %v1605 = vunpack.c.l.b16 %v1306
    %v1606 = vunpack.c.l.b16 %v1307
    %v1607 = vunpack.c.h.b16 %v1307
    %v1608 = vunpack.c.l.b16 %v1308
    %v1609 = vunpack.c.h.b16 %v1308
    %v1610 = vunpack.c.l.b16 %v1309
    %v1611 = vunpack.c.h.b16 %v1309
    %v1612 = vunpack.c.l.b16 %v1310
    %v1613 = vunpack.c.l.b16 %v1311
    %v1614 = vunpack.c.h.b16 %v1311
    %v1615 = vunpack.c.l.b16 %v1312
    %v1616 = vunpack.c.h.b16 %v1312
    %v1617 = vunpack.c.l.b16 %v1313
    %v1618 = vunpack.c.h.b16 %v1313
    %v1619 = vunpack.c.l.b16 %v1314
    %v1620 = vunpack.c.l.b16 %v1315
    %v1621 = vunpack.c.h.b16 %v1315
    %v1622 = vunpack.c.l.b16 %v1316
    %v1623 = vunpack.c.h.b16 %v1316
    %v1624 = vunpack.c.l.b16 %v1317
    %v1625 = vunpack.c.h.b16 %v1317
    %v1626 = vunpack.c.l.b16 %v1318
    %v1627 = vunpack.c.l.b16 %v1319
    %v1628 = vunpack.c.h.b16 %v1319
    %v1629 = vunpack.c.l.b16 %v1320
    %v1630 = vunpack.c.h.b16 %v1320
    %v1631 = vunpack.c.l.b16 %v1321
    %v1632 = vunpack.c.h.b16 %v1321
    %v1633 = vunpack.c.l.b16 %v1322
    %v1634 = vunpack.c.l.b16 %v1323
    %v1635 = vunpack.c.h.b16 %v1323
    %v1636 = vunpack.c.l.b16 %v1324
    %v1637 = vunpack.c.h.b16 %v1324
    %v1638 = vunpack.c.l.b16 %v1325
    %v1639 = vunpack.c.h.b16 %v1325
    %v1640 = vunpack.c.l.b16 %v1326
    %v1641 = vunpack.c.l.b16 %v1327
    %v1642 = vunpack.c.h.b16 %v1327
    %v1643 = vunpack.c.l.b16 %v1328
    %v1644 = vunpack.c.h.b16 %v1328
    %v1645 = vunpack.c.l.b16 %v1329
    %v1646 = vunpack.c.h.b16 %v1329
    %v1647 = vunpack.c.l.b16 %v1330
    %v1648 = vunpack.c.l.b16 %v1331
    %v1649 = vunpack.c.h.b16 %v1331
    %v1650 = vunpack.c.l.b16 %v1332
    %v1651 = vunpack.c.h.b16 %v1332
    %v1652 = vunpack.c.l.b16 %v1333
    %v1653 = vunpack.c.h.b16 %v1333
    %v1654 = vunpack.c.l.b16 %v1334
    %v1655 = vunpack.c.l.b16 %v1335
    %v1656 = vunpack.c.h.b16 %v1335
    %v1657 = vunpack.c.l.b16 %v1336
    %v1658 = vunpack.c.h.b16 %v1336
    %v1659 = vunpack.c.l.b16 %v1337
    %v1660 = vunpack.c.h.b16 %v1337
    %v1661 = vunpack.c.l.b16 %v1338
    %v1662 = vunpack.c.l.b16 %v1339
    %v1663 = vunpack.c.h.b16 %v1339
    %v1664 = vunpack.c.l.b16 %v1340
    %v1665 = vunpack.c.h.b16 %v1340
    %v1666 = vunpack.c.l.b16 %v1341
    %v1667 = vunpack.c.h.b16 %v1341
    %v1668 = vunpack.c.l.b16 %v1342
    %v1669 = vunpack.c.l.b16 %v1343
    %v1670 = vunpack.c.h.b16 %v1343
    %v1671 = vunpack.c.l.b16 %v1344
    %v1672 = vunpack.c.h.b16 %v1344
    %v1673 = vunpack.c.l.b16 %v1345
    %v1674 = vunpack.c.h.b16 %v1345
    %v1675 = vunpack.c.l.b16 %v1346
    %v1676 = vunpack.c.l.b16 %v1347
    %v1677 = vunpack.c.h.b16 %v1347
    %v1678 = vunpack.c.l.b16 %v1348
    %v1679 = vunpack.c.h.b16 %v1348
    %v1680 = vunpack.c.l.b16 %v1349
    %v1681 = vunpack.c.h.b16 %v1349
    %v1682 = vunpack.c.l.b16 %v1350
    %v1683 = vunpack.c.l.b16 %v1351
    %v1684 = vunpack.c.h.b16 %v1351
    %v1685 = vunpack.c.l.b16 %v1352
    %v1686 = vunpack.c.h.b16 %v1352
    %v1687 = vunpack.c.l.b16 %v1353
    %v1688 = vunpack.c.h.b16 %v1353
    %v1689 = vunpack.c.l.b16 %v1354
    %v1690 = vunpack.c.l.b16 %v1355
    %v1691 = vunpack.c.h.b16 %v1355
    %v1692 = vunpack.c.l.b16 %v1356
    %v1693 = vunpack.c.h.b16 %v1356
    %v1694 = vunpack.c.l.b16 %v1357
    %v1695 = vunpack.c.h.b16 %v1357
    %v1696 = vunpack.c.l.b16 %v1358
    %v1697 = vunpack.c.l.b16 %v1359
    %v1698 = vunpack.c.h.b16 %v1359
    %v1699 = vunpack.c.l.b16 %v1360
    %v1700 = vunpack.c.h.b16 %v1360
    %v1701 = vunpack.c.l.b16 %v1361
    %v1702 = vunpack.c.h.b16 %v1361
    %v1703 = vunpack.c.l.b16 %v1362
    %v1704 = vunpack.c.l.b16 %v1363
    %v1705 = vunpack.c.h.b16 %v1363
    %v1706 = vunpack.c.l.b16 %v1364
    %v1707 = vunpack.c.h.b16 %v1364
    %v1708 = vunpack.c.l.b16 %v1365
    %v1709 = vunpack.c.h.b16 %v1365
    %v1710 = vunpack.c.l.b16 %v1366
    %v1711 = vunpack.c.l.b16 %v1367
    %v1712 = vunpack.c.h.b16 %v1367
    %v1713 = vunpack.c.l.b16 %v1368
    %v1714 = vunpack.c.h.b16 %v1368
    %v1715 = vunpack.c.l.b16 %v1369
    %v1716 = vunpack.c.h.b16 %v1369
    %v1717 = vunpack.c.l.b16 %v1370
    %v1718 = vunpack.c.l.b16 %v1371
    %v1719 = vunpack.c.h.b16 %v1371
    %v1720 = vunpack.c.l.b16 %v1372
    %v1721 = vunpack.c.h.b16 %v1372
    %v1722 = vunpack.c.l.b16 %v1373
    %v1723 = vunpack.c.h.b16 %v1373
    %v1724 = vunpack.c.l.b16 %v1374
    %v1725 = vunpack.c.l.b16 %v1375
    %v1726 = vunpack.c.h.b16 %v1375
    %v1727 = vunpack.c.l.b16 %v1376
    %v1728 = vunpack.c.h.b16 %v1376
    %v1729 = vunpack.c.l.b16 %v1377
    %v1730 = vunpack.c.h.b16 %v1377
    %v1731 = vunpack.c.l.b16 %v1378
    %v1732 = vunpack.c.l.b16 %v1379
    %v1733 = vunpack.c.h.b16 %v1379
    %v1734 = vunpack.c.l.b16 %v1380
    %v1735 = vunpack.c.h.b16 %v1380
    %v1736 = vunpack.c.l.b16 %v1381
    %v1737 = vunpack.c.h.b16 %v1381
    %v1738 = vunpack.c.l.b16 %v1382
    %v1739 = vunpack.c.l.b16 %v1383
    %v1740 = vunpack.c.h.b16 %v1383
    %v1741 = vunpack.c.l.b16 %v1384
    %v1742 = vunpack.c.h.b16 %v1384
    %v1743 = vunpack.c.l.b16 %v1385
    %v1744 = vunpack.c.h.b16 %v1385
    %v1745 = vunpack.c.l.b16 %v1386
    %v1746 = vunpack.c.l.b16 %v1387
    %v1747 = vunpack.c.h.b16 %v1387
    %v1748 = vunpack.c.l.b16 %v1388
    %v1749 = vunpack.c.h.b16 %v1388
    %v1750 = vunpack.c.l.b16 %v1389
    %v1751 = vunpack.c.h.b16 %v1389
    %v1752 = vunpack.c.l.b16 %v1390
    %v1753 = vunpack.c.l.b16 %v1391
    %v1754 = vunpack.c.h.b16 %v1391
    %v1755 = vunpack.c.l.b16 %v1392
    %v1756 = vunpack.c.h.b16 %v1392
    %v1757 = vunpack.c.l.b16 %v1393
    %v1758 = vunpack.c.h.b16 %v1393
    %v1759 = vunpack.c.l.b16 %v1394
    %v1760 = vunpack.c.l.b16 %v1395
    %v1761 = vunpack.c.h.b16 %v1395
    %v1762 = vunpack.c.l.b16 %v1396
    %v1763 = vunpack.c.h.b16 %v1396
    %v1764 = vunpack.c.l.b16 %v1397
    %v1765 = vunpack.c.h.b16 %v1397
    %v1766 = vunpack.c.l.b16 %v1398
    %v1767 = vpack.c.b16 %v1550, %v1543
    %v1768 = vpack.c.b16 %v1551, %v1544
    %v1769 = vpack.c.b16 %v1552, %v1545
    %v1770 = vpack.c.b16 %v1553, %v1546
    %v1771 = vpack.c.b16 %v1554, %v1547
    %v1772 = vpack.c.b16 %v1555, %v1548
    %v1773 = vpack.c.b16 %v1556, %v1549
    %v1774 = vpack.c.b16 %v1564, %v1557
    %v1775 = vpack.c.b16 %v1565, %v1558
    %v1776 = vpack.c.b16 %v1566, %v1559
    %v1777 = vpack.c.b16 %v1567, %v1560
    %v1778 = vpack.c.b16 %v1568, %v1561
    %v1779 = vpack.c.b16 %v1569, %v1562
    %v1780 = vpack.c.b16 %v1570, %v1563
    %v1781 = vpack.c.b16 %v1578, %v1571
    %v1782 = vpack.c.b16 %v1579, %v1572
    %v1783 = vpack.c.b16 %v1580, %v1573
    %v1784 = vpack.c.b16 %v1581, %v1574
    %v1785 = vpack.c.b16 %v1582, %v1575
    %v1786 = vpack.c.b16 %v1583, %v1576
    %v1787 = vpack.c.b16 %v1584, %v1577
    %v1788 = vpack.c.b16 %v1592, %v1585
    %v1789 = vpack.c.b16 %v1593, %v1586
    %v1790 = vpack.c.b16 %v1594, %v1587
    %v1791 = vpack.c.b16 %v1595, %v1588
    %v1792 = vpack.c.b16 %v1596, %v1589
    %v1793 = vpack.c.b16 %v1597, %v1590
    %v1794 = vpack.c.b16 %v1598, %v1591
    %v1795 = vpack.c.b16 %v1606, %v1599
    %v1796 = vpack.c.b16 %v1607, %v1600
    %v1797 = vpack.c.b16 %v1608, %v1601
    %v1798 = vpack.c.b16 %v1609, %v1602
    %v1799 = vpack.c.b16 %v1610, %v1603
    %v1800 = vpack.c.b16 %v1611, %v1604
    %v1801 = vpack.c.b16 %v1612, %v1605
    %v1802 = vpack.c.b16 %v1620, %v1613
    %v1803 = vpack.c.b16 %v1621, %v1614
    %v1804 = vpack.c.b16 %v1622, %v1615
    %v1805 = vpack.c.b16 %v1623, %v1616
    %v1806 = vpack.c.b16 %v1624, %v1617
    %v1807 = vpack.c.b16 %v1625, %v1618
    %v1808 = vpack.c.b16 %v1626, %v1619
    %v1809 = vpack.c.b16 %v1634, %v1627
    %v1810 = vpack.c.b16 %v1635, %v1628
    %v1811 = vpack.c.b16 %v1636, %v1629
    %v1812 = vpack.c.b16 %v1637, %v1630
    %v1813 = vpack.c.b16 %v1638, %v1631
    %v1814 = vpack.c.b16 %v1639, %v1632
    %v1815 = vpack.c.b16 %v1640, %v1633
    %v1816 = vpack.c.b16 %v1648, %v1641
    %v1817 = vpack.c.b16 %v1649, %v1642
    %v1818 = vpack.c.b16 %v1650, %v1643
    %v1819 = vpack.c.b16 %v1651, %v1644
    %v1820 = vpack.c.b16 %v1652, %v1645
    %v1821 = vpack.c.b16 %v1653, %v1646
    %v1822 = vpack.c.b16 %v1654, %v1647
    %v1823 = vpack.c.b16 %v1662, %v1655
    %v1824 = vpack.c.b16 %v1663, %v1656
    %v1825 = vpack.c.b16 %v1664, %v1657
    %v1826 = vpack.c.b16 %v1665, %v1658
    %v1827 = vpack.c.b16 %v1666, %v1659
    %v1828 = vpack.c.b16 %v1667, %v1660
    %v1829 = vpack.c.b16 %v1668, %v1661
    %v1830 = vpack.c.b16 %v1676, %v1669
    %v1831 = vpack.c.b16 %v1677, %v1670
    %v1832 = vpack.c.b16 %v1678, %v1671
    %v1833 = vpack.c.b16 %v1679, %v1672
    %v1834 = vpack.c.b16 %v1680, %v1673
    %v1835 = vpack.c.b16 %v1681, %v1674
    %v1836 = vpack.c.b16 %v1682, %v1675
    %v1837 = vpack.c.b16 %v1690, %v1683
    %v1838 = vpack.c.b16 %v1691, %v1684
    %v1839 = vpack.c.b16 %v1692, %v1685
    %v1840 = vpack.c.b16 %v1693, %v1686
    %v1841 = vpack.c.b16 %v1694, %v1687
    %v1842 = vpack.c.b16 %v1695, %v1688
    %v1843 = vpack.c.b16 %v1696, %v1689
    %v1844 = vpack.c.b16 %v1704, %v1697
    %v1845 = vpack.c.b16 %v1705, %v1698
    %v1846 = vpack.c.b16 %v1706, %v1699
    %v1847 = vpack.c.b16 %v1707, %v1700
    %v1848 = vpack.c.b16 %v1708, %v1701
    %v1849 = vpack.c.b16 %v1709, %v1702
    %v1850 = vpack.c.b16 %v1710, %v1703
    %v1851 = vpack.c.b16 %v1718, %v1711
    %v1852 = vpack.c.b16 %v1719, %v1712
    %v1853 = vpack.c.b16 %v1720, %v1713
    %v1854 = vpack.c.b16 %v1721, %v1714
    %v1855 = vpack.c.b16 %v1722, %v1715
    %v1856 = vpack.c.b16 %v1723, %v1716
    %v1857 = vpack.c.b16 %v1724, %v1717
    %v1858 = vpack.c.b16 %v1732, %v1725
    %v1859 = vpack.c.b16 %v1733, %v1726
    %v1860 = vpack.c.b16 %v1734, %v1727
    %v1861 = vpack.c.b16 %v1735, %v1728
    %v1862 = vpack.c.b16 %v1736, %v1729
    %v1863 = vpack.c.b16 %v1737, %v1730
    %v1864 = vpack.c.b16 %v1738, %v1731
    %v1865 = vpack.c.b16 %v1746, %v1739
    %v1866 = vpack.c.b16 %v1747, %v1740
    %v1867 = vpack.c.b16 %v1748, %v1741
    %v1868 = vpack.c.b16 %v1749, %v1742
    %v1869 = vpack.c.b16 %v1750, %v1743
    %v1870 = vpack.c.b16 %v1751, %v1744
    %v1871 = vpack.c.b16 %v1752, %v1745
    %v1872 = vpack.c.b16 %v1760, %v1753
    %v1873 = vpack.c.b16 %v1761, %v1754
    %v1874 = vpack.c.b16 %v1762, %v1755
    %v1875 = vpack.c.b16 %v1763, %v1756
    %v1876 = vpack.c.b16 %v1764, %v1757
    %v1877 = vpack.c.b16 %v1765, %v1758
    %v1878 = vpack.c.b16 %v1766, %v1759
    %1991 = vmatpush.bf16.msra.mxu0 %v1816
    %1992 = vmatpush.bf16.msra.mxu0 %v1809
    %1993 = vmatpush.bf16.msra.mxu0 %v1802
    %1994 = vmatpush.bf16.msra.mxu0 %v1795
    %1995 = vmatpush.bf16.msra.mxu0 %v1788
    %1996 = vmatpush.bf16.msra.mxu0 %v1781
    %1997 = vmatpush.bf16.msra.mxu0 %v1774
    %1998 = vmatpush.bf16.msra.mxu0 %v1767
    %1999 = vmatmul.bf16.gmra.mxu0 %v1269
    %v2000 = vpop.f32.mrf.mxu0
    %v2001 = vadd.f32 %v1401, %v2000
    %v2002 = vpop.f32.mrf.mxu0
    %2003 = vdwg.mxu0
    %2004 = vmatpush.bf16.msra.mxu0 %v1872
    %2005 = vmatpush.bf16.msra.mxu0 %v1865
    %2006 = vmatpush.bf16.msra.mxu0 %v1858
    %2007 = vmatpush.bf16.msra.mxu0 %v1851
    %2008 = vmatpush.bf16.msra.mxu0 %v1844
    %2009 = vmatpush.bf16.msra.mxu0 %v1837
    %2010 = vmatpush.bf16.msra.mxu0 %v1830
    %2011 = vmatpush.bf16.msra.mxu0 %v1823
    %2012 = vmatmul.bf16.gmra.mxu0 %v1270
    %v2013 = vpop.f32.mrf.mxu0
    %v2014 = vadd.f32 %v2001, %v2013
    %v2015 = vpop.f32.mrf.mxu0
    %2016 = vdwg.mxu0
    %2017 = vmatpush.bf16.msra.mxu0 %v1817
    %2018 = vmatpush.bf16.msra.mxu0 %v1810
    %2019 = vmatpush.bf16.msra.mxu0 %v1803
    %2020 = vmatpush.bf16.msra.mxu0 %v1796
    %2021 = vmatpush.bf16.msra.mxu0 %v1789
    %2022 = vmatpush.bf16.msra.mxu0 %v1782
    %2023 = vmatpush.bf16.msra.mxu0 %v1775
    %2024 = vmatpush.bf16.msra.mxu0 %v1768
    %2025 = vmatmul.bf16.gmra.mxu0 %v1269
    %v2026 = vpop.f32.mrf.mxu0
    %v2027 = vadd.f32 %v1402, %v2026
    %v2028 = vpop.f32.mrf.mxu0
    %2029 = vdwg.mxu0
    %2030 = vmatpush.bf16.msra.mxu0 %v1873
    %2031 = vmatpush.bf16.msra.mxu0 %v1866
    %2032 = vmatpush.bf16.msra.mxu0 %v1859
    %2033 = vmatpush.bf16.msra.mxu0 %v1852
    %2034 = vmatpush.bf16.msra.mxu0 %v1845
    %2035 = vmatpush.bf16.msra.mxu0 %v1838
    %2036 = vmatpush.bf16.msra.mxu0 %v1831
    %2037 = vmatpush.bf16.msra.mxu0 %v1824
    %2038 = vmatmul.bf16.gmra.mxu0 %v1270
    %v2039 = vpop.f32.mrf.mxu0
    %v2040 = vadd.f32 %v2027, %v2039
    %v2041 = vpop.f32.mrf.mxu0
    %2042 = vdwg.mxu0
    %2043 = vmatpush.bf16.msra.mxu0 %v1818
    %2044 = vmatpush.bf16.msra.mxu0 %v1811
    %2045 = vmatpush.bf16.msra.mxu0 %v1804
    %2046 = vmatpush.bf16.msra.mxu0 %v1797
    %2047 = vmatpush.bf16.msra.mxu0 %v1790
    %2048 = vmatpush.bf16.msra.mxu0 %v1783
    %2049 = vmatpush.bf16.msra.mxu0 %v1776
    %2050 = vmatpush.bf16.msra.mxu0 %v1769
    %2051 = vmatmul.bf16.gmra.mxu0 %v1269
    %v2052 = vpop.f32.mrf.mxu0
    %v2053 = vadd.f32 %v1403, %v2052
    %v2054 = vpop.f32.mrf.mxu0
    %2055 = vdwg.mxu0
    %2056 = vmatpush.bf16.msra.mxu0 %v1874
    %2057 = vmatpush.bf16.msra.mxu0 %v1867
    %2058 = vmatpush.bf16.msra.mxu0 %v1860
    %2059 = vmatpush.bf16.msra.mxu0 %v1853
    %2060 = vmatpush.bf16.msra.mxu0 %v1846
    %2061 = vmatpush.bf16.msra.mxu0 %v1839
    %2062 = vmatpush.bf16.msra.mxu0 %v1832
    %2063 = vmatpush.bf16.msra.mxu0 %v1825
    %2064 = vmatmul.bf16.gmra.mxu0 %v1270
    %v2065 = vpop.f32.mrf.mxu0
    %v2066 = vadd.f32 %v2053, %v2065
    %v2067 = vpop.f32.mrf.mxu0
    %2068 = vdwg.mxu0
    %2069 = vmatpush.bf16.msra.mxu0 %v1819
    %2070 = vmatpush.bf16.msra.mxu0 %v1812
    %2071 = vmatpush.bf16.msra.mxu0 %v1805
    %2072 = vmatpush.bf16.msra.mxu0 %v1798
    %2073 = vmatpush.bf16.msra.mxu0 %v1791
    %2074 = vmatpush.bf16.msra.mxu0 %v1784
    %2075 = vmatpush.bf16.msra.mxu0 %v1777
    %2076 = vmatpush.bf16.msra.mxu0 %v1770
    %2077 = vmatmul.bf16.gmra.mxu0 %v1269
    %v2078 = vpop.f32.mrf.mxu0
    %v2079 = vadd.f32 %v1404, %v2078
    %v2080 = vpop.f32.mrf.mxu0
    %2081 = vdwg.mxu0
    %2082 = vmatpush.bf16.msra.mxu0 %v1875
    %2083 = vmatpush.bf16.msra.mxu0 %v1868
    %2084 = vmatpush.bf16.msra.mxu0 %v1861
    %2085 = vmatpush.bf16.msra.mxu0 %v1854
    %2086 = vmatpush.bf16.msra.mxu0 %v1847
    %2087 = vmatpush.bf16.msra.mxu0 %v1840
    %2088 = vmatpush.bf16.msra.mxu0 %v1833
    %2089 = vmatpush.bf16.msra.mxu0 %v1826
    %2090 = vmatmul.bf16.gmra.mxu0 %v1270
    %v2091 = vpop.f32.mrf.mxu0
    %v2092 = vadd.f32 %v2079, %v2091
    %v2093 = vpop.f32.mrf.mxu0
    %2094 = vdwg.mxu0
    %2095 = vmatpush.bf16.msra.mxu0 %v1820
    %2096 = vmatpush.bf16.msra.mxu0 %v1813
    %2097 = vmatpush.bf16.msra.mxu0 %v1806
    %2098 = vmatpush.bf16.msra.mxu0 %v1799
    %2099 = vmatpush.bf16.msra.mxu0 %v1792
    %2100 = vmatpush.bf16.msra.mxu0 %v1785
    %2101 = vmatpush.bf16.msra.mxu0 %v1778
    %2102 = vmatpush.bf16.msra.mxu0 %v1771
    %2103 = vmatmul.bf16.gmra.mxu0 %v1269
    %v2104 = vpop.f32.mrf.mxu0
    %v2105 = vadd.f32 %v1405, %v2104
    %v2106 = vpop.f32.mrf.mxu0
    %2107 = vdwg.mxu0
    %2108 = vmatpush.bf16.msra.mxu0 %v1876
    %2109 = vmatpush.bf16.msra.mxu0 %v1869
    %2110 = vmatpush.bf16.msra.mxu0 %v1862
    %2111 = vmatpush.bf16.msra.mxu0 %v1855
    %2112 = vmatpush.bf16.msra.mxu0 %v1848
    %2113 = vmatpush.bf16.msra.mxu0 %v1841
    %2114 = vmatpush.bf16.msra.mxu0 %v1834
    %2115 = vmatpush.bf16.msra.mxu0 %v1827
    %2116 = vmatmul.bf16.gmra.mxu0 %v1270
    %v2117 = vpop.f32.mrf.mxu0
    %v2118 = vadd.f32 %v2105, %v2117
    %v2119 = vpop.f32.mrf.mxu0
    %2120 = vdwg.mxu0
    %2121 = vmatpush.bf16.msra.mxu0 %v1821
    %2122 = vmatpush.bf16.msra.mxu0 %v1814
    %2123 = vmatpush.bf16.msra.mxu0 %v1807
    %2124 = vmatpush.bf16.msra.mxu0 %v1800
    %2125 = vmatpush.bf16.msra.mxu0 %v1793
    %2126 = vmatpush.bf16.msra.mxu0 %v1786
    %2127 = vmatpush.bf16.msra.mxu0 %v1779
    %2128 = vmatpush.bf16.msra.mxu0 %v1772
    %2129 = vmatmul.bf16.gmra.mxu0 %v1269
    %v2130 = vpop.f32.mrf.mxu0
    %v2131 = vadd.f32 %v1406, %v2130
    %v2132 = vpop.f32.mrf.mxu0
    %2133 = vdwg.mxu0
    %2134 = vmatpush.bf16.msra.mxu0 %v1877
    %2135 = vmatpush.bf16.msra.mxu0 %v1870
    %2136 = vmatpush.bf16.msra.mxu0 %v1863
    %2137 = vmatpush.bf16.msra.mxu0 %v1856
    %2138 = vmatpush.bf16.msra.mxu0 %v1849
    %2139 = vmatpush.bf16.msra.mxu0 %v1842
    %2140 = vmatpush.bf16.msra.mxu0 %v1835
    %2141 = vmatpush.bf16.msra.mxu0 %v1828
    %2142 = vmatmul.bf16.gmra.mxu0 %v1270
    %v2143 = vpop.f32.mrf.mxu0
    %v2144 = vadd.f32 %v2131, %v2143
    %v2145 = vpop.f32.mrf.mxu0
    %2146 = vdwg.mxu0
    %2147 = vmatpush.bf16.msra.mxu0 %v1822
    %2148 = vmatpush.bf16.msra.mxu0 %v1815
    %2149 = vmatpush.bf16.msra.mxu0 %v1808
    %2150 = vmatpush.bf16.msra.mxu0 %v1801
    %2151 = vmatpush.bf16.msra.mxu0 %v1794
    %2152 = vmatpush.bf16.msra.mxu0 %v1787
    %2153 = vmatpush.bf16.msra.mxu0 %v1780
    %2154 = vmatpush.bf16.msra.mxu0 %v1773
    %2155 = vmatmul.bf16.gmra.mxu0 %v1269
    %v2156 = vpop.f32.mrf.mxu0
    %v2157 = vadd.f32 %v1407, %v2156
    %v2158 = vpop.f32.mrf.mxu0
    %2159 = vdwg.mxu0
    %2160 = vmatpush.bf16.msra.mxu0 %v1878
    %2161 = vmatpush.bf16.msra.mxu0 %v1871
    %2162 = vmatpush.bf16.msra.mxu0 %v1864
    %2163 = vmatpush.bf16.msra.mxu0 %v1857
    %2164 = vmatpush.bf16.msra.mxu0 %v1850
    %2165 = vmatpush.bf16.msra.mxu0 %v1843
    %2166 = vmatpush.bf16.msra.mxu0 %v1836
    %2167 = vmatpush.bf16.msra.mxu0 %v1829
    %2168 = vmatmul.bf16.gmra.mxu0 %v1270
    %v2169 = vpop.f32.mrf.mxu0
    %v2170 = vadd.f32 %v2157, %v2169
    %v2171 = vpop.f32.mrf.mxu0
    %2172 = vdwg.mxu0
    %v2173 = vsub.f32 0.0, %v2014
    %v2174 = vsub.f32 0.0, %v2040
    %v2175 = vsub.f32 0.0, %v2066
    %v2176 = vsub.f32 0.0, %v2092
    %v2177 = vsub.f32 0.0, %v2118
    %v2178 = vsub.f32 0.0, %v2144
    %v2179 = vsub.f32 0.0, %v2170
    %v2180 = vmul.f32 %v2173, 1.442695
    %v2181 = vpow.pop %v2180
    %v2182 = vmul.f32 %v2174, 1.442695
    %v2183 = vpow.pop %v2182
    %v2184 = vmul.f32 %v2175, 1.442695
    %v2185 = vpow.pop %v2184
    %v2186 = vmul.f32 %v2176, 1.442695
    %v2187 = vpow.pop %v2186
    %v2188 = vmul.f32 %v2177, 1.442695
    %v2189 = vpow.pop %v2188
    %v2190 = vmul.f32 %v2178, 1.442695
    %v2191 = vpow.pop %v2190
    %v2192 = vmul.f32 %v2179, 1.442695
    %v2193 = vpow.pop %v2192
    %v2194 = vadd.f32 %v2181, 1.0
    %v2195 = vadd.f32 %v2183, 1.0
    %v2196 = vadd.f32 %v2185, 1.0
    %v2197 = vadd.f32 %v2187, 1.0
    %v2198 = vadd.f32 %v2189, 1.0
    %v2199 = vadd.f32 %v2191, 1.0
    %v2200 = vadd.f32 %v2193, 1.0
    %v2201 = vrcp.pop %v2194
    %v2202 = vrcp.pop %v2195
    %v2203 = vrcp.pop %v2196
    %v2204 = vrcp.pop %v2197
    %v2205 = vrcp.pop %v2198
    %v2206 = vrcp.pop %v2199
    %v2207 = vrcp.pop %v2200
    %v2208 = vpack.c.bf16 %v2202, %v2201
    %v2209 = vpack.c.bf16 %v2204, %v2203
    %v2210 = vpack.c.bf16 %v2206, %v2205
    %v2211 = vpack.c.bf16 %v2207, %v2207
    %2212 = vst [vmem:[#allocation16] sm:$0xff] %v2208
    %2213 = vst [vmem:[#allocation16 + $0x8] sm:$0xff] %v2209
    %2214 = vst [vmem:[#allocation16 + $0x10] sm:$0xff] %v2210
    %2215 = vst [vmem:[#allocation16 + $0x18] sm:$0xf] %v2211
    %2216 = vst [vmem:[#allocation17] sm:$0xff] %v1205
    // Predicated region
    $region74: #{tpu_custom_call.1} parent=1 // pred_check
      _
    $region75: #{tpu_custom_call.1} parent=1 // pred_check_branch
      %2218 = sbr.rel (0) target = $region77
    $region76: #{tpu_custom_call.1} parent=1 // pred_region
      %2220 = vsyncadd [#allocation4], 0
      %s2222 = sshll.u32 [#allocation16], 4
      %s2223 = int_to_ptr.vmem [resolvable:$true] %s2222
      %s2224 = sshll.u32 %s10, 4
      %s2225 = int_to_ptr.hbm [resolvable:$true] %s2224
      %2227 = dma.vmem_to_hbm [thread:$0]  %s2223, 448, %s2225, [#allocation4]
    $region77: #{tpu_custom_call.1} parent=1 // pred_fallthru
      _
    // Predicated region
    $region78: #{tpu_custom_call.1} parent=1 // pred_check
      _
    $region79: #{tpu_custom_call.1} parent=1 // pred_check_branch
      %2229 = sbr.rel (0) target = $region81
    $region80: #{tpu_custom_call.1} parent=1 // pred_region
      %2231 = vsyncadd [#allocation18], 0
      %s2233 = sshll.u32 [#allocation17], 4
      %s2234 = int_to_ptr.vmem [resolvable:$true] %s2233
      %s2235 = sshll.u32 %s11, 4
      %s2236 = int_to_ptr.hbm [resolvable:$true] %s2235
      %2238 = dma.vmem_to_hbm [thread:$0]  %s2234, 128, %s2236, [#allocation18]
    $region81: #{tpu_custom_call.1} parent=1 // pred_fallthru
      _
    // Predicated region
    $region82: #{tpu_custom_call.1} parent=1 // pred_check
      _
    $region83: #{tpu_custom_call.1} parent=1 // pred_check_branch
      %2240 = sbr.rel (0) target = $region85
    $region84: #{tpu_custom_call.1} parent=1 // pred_region
      %2242 = dma.done [#allocation4], 448
    $region85: #{tpu_custom_call.1} parent=1 // pred_fallthru
      _
    // Predicated region
    $region86: #{tpu_custom_call.1} parent=1 // pred_check
      _
    $region87: #{tpu_custom_call.1} parent=1 // pred_check_branch
      %2244 = sbr.rel (0) target = $region89
    $region88: #{tpu_custom_call.1} parent=1 // pred_region
      %2246 = dma.done [#allocation18], 128
    $region89: #{tpu_custom_call.1} parent=1 // pred_fallthru
      _
    %2247 = vsyncpa [#allocation3], 1
    %2248 = vsyncpa [#allocation6], 1
    %2249 = vsyncpa [#allocation9], 1
    %2250 = vsyncpa [#allocation12], 1
    %2251 = vsyncpa [#allocation15], 1
    %2252 = vsyncpa [#allocation4], 1
    %2253 = vsyncpa [#allocation18], 1

</llo_original>
